<compile_context>
chip_gen: v7x
topology: tpu7x:2x2x1
jax: 0.10.0
libtpu: 0.0.40
codegen_flags: <defaults>
</compile_context>

<pallas_src>
import functools
import math

import jax
import jax.numpy as jnp
from jax import lax
from jax.experimental import pallas as pl
from jax.experimental.pallas import tpu as pltpu


def _rfe_kernel(x_ref,                  # VMEM (Bb*M, M) bf16
                w1_ref, b1_ref,         # (M, H) bf16, (1, H) f32   MLP layer 1 (conv folded in)
                w2_ref, b2_ref,         # (H, H) bf16, (1, H) f32   MLP layer 2
                gamma_ref, beta_ref,    # (1, H), (1, H) f32        LayerNorm affine
                wq_ref, bq_ref,         # (H, H) bf16, (1, H) f32   Q projection
                wk_ref, bk_ref,         # (H, H) bf16, (1, H) f32   K projection
                wv_ref, bv_ref,         # (H, H) bf16, (1, H) f32   V projection
                wop_ref, bop_ref,       # (H, H) bf16, (1, H) f32   fused out_proj @ output_proj
                out_ref,                # VMEM (Bb*M, H) f32
                *, num_heads, head_dim):
    R, M = x_ref.shape
    Bb = R // M
    H = num_heads * head_dim
    bf16 = jnp.bfloat16

    # RegionConvolution (1x1 conv + channel mean) + residual is a scalar affine
    # already folded into w1/b1 by the wrapper; x arrives bf16 from the wrapper.
    x = x_ref[...]                                                            # (R, M) bf16

    # RegionEmbeddingMLP: Linear(M, H) -> ReLU -> Linear(H, H), all rows at once.
    h1 = jnp.dot(x, w1_ref[...], preferred_element_type=jnp.float32) + b1_ref[...]
    h1 = jnp.maximum(h1, 0.0)
    x_reg = jnp.dot(h1.astype(bf16), w2_ref[...],
                    preferred_element_type=jnp.float32) + b2_ref[...]         # (R, H) f32

    # LayerNorm over hidden dim (f32, eps=1e-5, biased variance).
    mu = jnp.mean(x_reg, axis=-1, keepdims=True)
    var = jnp.mean((x_reg - mu) ** 2, axis=-1, keepdims=True)
    x_norm = ((x_reg - mu) * lax.rsqrt(var + 1e-5)
              * gamma_ref[...] + beta_ref[...]).astype(bf16)                  # (R, H) bf16

    # Q/K/V projections: three aligned (R,H)@(H,H) matmuls (no unaligned lane
    # slicing of a fused (R,3H) result since H % 128 != 0 here).
    q = (jnp.dot(x_norm, wq_ref[...], preferred_element_type=jnp.float32)
         + bq_ref[...]).astype(bf16).reshape(Bb, M, H)
    k = (jnp.dot(x_norm, wk_ref[...], preferred_element_type=jnp.float32)
         + bk_ref[...]).astype(bf16).reshape(Bb, M, H)
    v = (jnp.dot(x_norm, wv_ref[...], preferred_element_type=jnp.float32)
         + bv_ref[...]).astype(bf16).reshape(Bb, M, H)

    # Head-batched attention: stack heads on the leading batch axis so the
    # score/context matmuls are one batched dot pair and the softmax is a
    # single reduction chain over all (head, batch) rows.
    def stack_heads(t):                                  # (Bb, M, H) -> (NH*Bb, M, hd)
        return jnp.concatenate(
            [t[:, :, h * head_dim:(h + 1) * head_dim] for h in range(num_heads)],
            axis=0)

    qh, kh, vh = stack_heads(q), stack_heads(k), stack_heads(v)

    scale = 1.0 / math.sqrt(head_dim)
    s = jnp.einsum('bmd,bnd->bmn', qh, kh,
                   preferred_element_type=jnp.float32) * scale               # (NH*Bb, M, M)

    # torch mask = triu(1)+tril(-1): the diagonal *score* is zeroed (not -inf).
    diag = (lax.broadcasted_iota(jnp.int32, (M, M), 0) ==
            lax.broadcasted_iota(jnp.int32, (M, M), 1))
    s = jnp.where(diag[None, :, :], 0.0, s)

    # Single softmax chain over all heads/batches.
    s_max = jnp.max(s, axis=-1, keepdims=True)
    p = jnp.exp(s - s_max)
    p = p * pl.reciprocal(jnp.sum(p, axis=-1, keepdims=True), approx=True)
    # TODO(synk): attention dropout (p=0.1) is identity at inference; not implemented.

    ctx = jnp.einsum('bmn,bnd->bmd', p.astype(bf16), vh,
                     preferred_element_type=jnp.float32)                     # (NH*Bb, M, hd)

    # Un-stack heads back into the hidden dim (lane concat keeps contexts in
    # vregs -- no VMEM scratch, no masked head_dim-wide stores).
    ctx = jnp.concatenate(
        [ctx[h * Bb:(h + 1) * Bb] for h in range(num_heads)], axis=-1)       # (Bb, M, H)
    ctx = ctx.reshape(R, H).astype(bf16)

    # Fused (out_proj . output_proj), then residual with x_reg.
    attn = jnp.dot(ctx, wop_ref[...], preferred_element_type=jnp.float32) + bop_ref[...]
    out_ref[...] = attn + x_reg


def _pick_batch_block(B, M, target_rows=512):
    """Largest divisor of B giving ~target_rows rows (Bb*M) per grid step, while
    keeping the grid length >= 2 when B >= 2 so v7x's two TensorCores can both
    work on the 'parallel' batch axis (one extra step costs ~0.35us elsewhere)."""
    bb = min(B, max(1, -(-target_rows // M)))
    while B % bb:
        bb -= 1
    if bb == B and B >= 2:
        bb = B // 2
        while B % bb:
            bb -= 1
    return bb


def region_feature_embedding(x, params, *, num_heads):
    B, M, R_in = x.shape
    assert R_in == M, "num_regions must equal M (as implied by RegionEmbeddingMLP)"
    H = params["w2"].shape[1]
    head_dim = H // num_heads
    assert head_dim * num_heads == H

    f32, bf16 = jnp.float32, jnp.bfloat16

    # 1x1 conv + channel-mean + residual == x <- (1 + mean(w)) * x + mean(b);
    # fold this scalar affine straight into the first MLP linear:
    #   ((1+wm)*x + bm) @ W1 + b1 = x @ ((1+wm)*W1) + (b1 + bm * colsum(W1)).
    w_mean = jnp.mean(params["conv_w"]).astype(f32)
    b_mean = jnp.mean(params["conv_b"]).astype(f32)
    w1 = ((1.0 + w_mean) * params["w1"]).astype(f32)
    b1 = (params["b1"] + b_mean * jnp.sum(params["w1"], axis=0, keepdims=True)).astype(f32)

    # Algebraically fused out_proj . output_proj.
    wop = (params["wo"] @ params["wp"]).astype(f32)
    bop = (params["bo"] @ params["wp"] + params["bp"]).astype(f32)

    # MXU operands in bf16 (accumulation stays f32 inside the kernel).
    w1_b = w1.astype(bf16)
    w2_b = params["w2"].astype(bf16)
    wq_b = params["wq"].astype(bf16)
    wk_b = params["wk"].astype(bf16)
    wv_b = params["wv"].astype(bf16)
    wop_b = wop.astype(bf16)

    b2 = params["b2"].astype(f32)
    gamma = params["gamma"].astype(f32)
    beta = params["beta"].astype(f32)
    bq = params["bq"].astype(f32)
    bk = params["bk"].astype(f32)
    bv = params["bv"].astype(f32)

    Bb = _pick_batch_block(B, M)
    grid = (B // Bb,)
    rows = Bb * M

    # Flatten x to 2D and cast to bf16 in HBM: lane-dense contiguous DMA tile,
    # half the input bytes per step.
    x2 = x.reshape(B * M, M).astype(bf16)

    def rep(shape):
        # Replicated (constant block index) weight/bias spec.
        # TODO(synk): pipeline_mode=pl.Buffered(1) would halve weight VMEM at large H (v7x).
        return pl.BlockSpec(shape, lambda i: (0, 0))

    in_specs = [
        pl.BlockSpec((rows, M), lambda i: (i, 0)),   # x block: Bb batches per grid step
        rep((M, H)), rep((1, H)),                    # w1, b1 (conv folded in)
        rep((H, H)), rep((1, H)),                    # w2, b2
        rep((1, H)), rep((1, H)),                    # gamma, beta
        rep((H, H)), rep((1, H)),                    # wq, bq
        rep((H, H)), rep((1, H)),                    # wk, bk
        rep((H, H)), rep((1, H)),                    # wv, bv
        rep((H, H)), rep((1, H)),                    # fused out/output proj
    ]

    # VMEM budget derived from actual block sizes (double-buffered x/out blocks,
    # double-buffered weights, headroom for in-kernel activations), clamped to
    # v7x's 64 MiB physical VMEM.
    weight_arrays = (w1_b, b1, w2_b, b2, gamma, beta,
                     wq_b, bq, wk_b, bk, wv_b, bv, wop_b, bop)
    w_bytes = sum(int(a.size) * a.dtype.itemsize for a in weight_arrays)
    x_bytes = rows * M * 2
    out_bytes = rows * H * 4
    act_bytes = rows * 6 * H * 4 + (Bb * num_heads) * M * M * 4 * 3
    vmem_need = 2 * (x_bytes + out_bytes + w_bytes) + act_bytes
    vmem_limit = int(min(max(2 * vmem_need, 16 * 1024 * 1024), 64 * 1024 * 1024))

    kernel = functools.partial(_rfe_kernel, num_heads=num_heads, head_dim=head_dim)
    out_flat = pl.pallas_call(
        kernel,
        out_shape=jax.ShapeDtypeStruct((B * M, H), f32),
        grid=grid,
        in_specs=in_specs,
        out_specs=pl.BlockSpec((rows, H), lambda i: (i, 0)),
        compiler_params=pltpu.CompilerParams(
            dimension_semantics=("parallel",),       # batch blocks are independent
            vmem_limit_bytes=vmem_limit,
        ),
    )(x2, w1_b, b1, w2_b, b2, gamma, beta,
      wq_b, bq, wk_b, bk, wv_b, bv, wop_b, bop)
    return out_flat.reshape(B, M, H)


def reference(x, params, *, num_heads):
    """Pure-JAX f32 reference mirroring the PyTorch forward (eval mode)."""
    w_mean = jnp.mean(params["conv_w"])
    b_mean = jnp.mean(params["conv_b"])
    x = x + (w_mean * x + b_mean)
    h1 = jnp.maximum(x @ params["w1"] + params["b1"], 0.0)
    x_reg = h1 @ params["w2"] + params["b2"]
    mu = x_reg.mean(-1, keepdims=True)
    var = ((x_reg - mu) ** 2).mean(-1, keepdims=True)
    xn = (x_reg - mu) / jnp.sqrt(var + 1e-5) * params["gamma"] + params["beta"]
    q = xn @ params["wq"] + params["bq"]
    k = xn @ params["wk"] + params["bk"]
    v = xn @ params["wv"] + params["bv"]
    B, M, H = q.shape
    hd = H // num_heads
    qh = q.reshape(B, M, num_heads, hd).transpose(0, 2, 1, 3)
    kh = k.reshape(B, M, num_heads, hd).transpose(0, 2, 1, 3)
    vh = v.reshape(B, M, num_heads, hd).transpose(0, 2, 1, 3)
    s = jnp.einsum("bhmd,bhnd->bhmn", qh, kh) / math.sqrt(hd)
    diag = jnp.eye(M, dtype=bool)
    s = jnp.where(diag[None, None], 0.0, s)
    p = jax.nn.softmax(s, axis=-1)
    ctx = jnp.einsum("bhmn,bhnd->bhmd", p, vh).transpose(0, 2, 1, 3).reshape(B, M, H)
    attn = ctx @ params["wo"] + params["bo"]
    attn = attn @ params["wp"] + params["bp"]
    return attn + x_reg


def make_params(key, num_regions, hidden_dim):
    """Deterministic synthetic parameters (torch Linear stored pre-transposed)."""
    M, H = num_regions, hidden_dim
    keys = jax.random.split(key, 20)
    n = lambda i, shape, s=0.1: (s * jax.random.normal(keys[i], shape)).astype(jnp.float32)
    return {
        "conv_w": n(0, (H,)),            # Conv2d(1, H, 1) weight values
        "conv_b": n(1, (H,)),
        "w1": n(2, (M, H)), "b1": n(3, (1, H)),
        "w2": n(4, (H, H)), "b2": n(5, (1, H)),
        "gamma": jnp.ones((1, H), jnp.float32), "beta": jnp.zeros((1, H), jnp.float32),
        "wq": n(6, (H, H)), "bq": n(7, (1, H)),
        "wk": n(8, (H, H)), "bk": n(9, (1, H)),
        "wv": n(10, (H, H)), "bv": n(11, (1, H)),
        "wo": n(12, (H, H)), "bo": n(13, (1, H)),
        "wp": n(14, (H, H)), "bp": n(15, (1, H)),
    }


if __name__ == "__main__":
    B, M, H, NH = 2, 8, 32, 8          # batch, num_regions (= M), hidden_dim, num_heads
    key = jax.random.PRNGKey(0)
    kx, kp = jax.random.split(key)
    x = jax.random.normal(kx, (B, M, M), dtype=jnp.float32)
    params = make_params(kp, M, H)

    out = jax.block_until_ready(region_feature_embedding(x, params, num_heads=NH))
    ref = jax.block_until_ready(reference(x, params, num_heads=NH))

    assert out.shape == (B, M, H)
    assert jnp.allclose(out, ref, rtol=2e-2, atol=2e-2), "mismatch vs JAX reference"

    print("KERNEL_OK")
</pallas_src>

<mosaic_0001>
module attributes {stable_mosaic.version = 11 : i64} {
  func.func @_rfe_kernel(%arg0: i32, %arg1: memref<8x8xbf16, #tpu.memory_space<vmem>>, %arg2: memref<8x32xbf16, #tpu.memory_space<vmem>>, %arg3: memref<1x32xf32, #tpu.memory_space<vmem>>, %arg4: memref<32x32xbf16, #tpu.memory_space<vmem>>, %arg5: memref<1x32xf32, #tpu.memory_space<vmem>>, %arg6: memref<1x32xf32, #tpu.memory_space<vmem>>, %arg7: memref<1x32xf32, #tpu.memory_space<vmem>>, %arg8: memref<32x32xbf16, #tpu.memory_space<vmem>>, %arg9: memref<1x32xf32, #tpu.memory_space<vmem>>, %arg10: memref<32x32xbf16, #tpu.memory_space<vmem>>, %arg11: memref<1x32xf32, #tpu.memory_space<vmem>>, %arg12: memref<32x32xbf16, #tpu.memory_space<vmem>>, %arg13: memref<1x32xf32, #tpu.memory_space<vmem>>, %arg14: memref<32x32xbf16, #tpu.memory_space<vmem>>, %arg15: memref<1x32xf32, #tpu.memory_space<vmem>>, %arg16: memref<8x32xf32, #tpu.memory_space<vmem>>) attributes {dimension_semantics = [#tpu.dimension_semantics<parallel>], iteration_bounds = array<i64: 2>, scalar_prefetch = 0 : i64, scratch_operands = 0 : i64, tpu.core_type = #tpu.core_type<tc>, window_params = [{transform_indices = @transform_0, window_bounds = array<i64: 8, 8>}, {pipeline_mode = #tpu.pipeline_mode<synchronous>, transform_indices = @transform_1, window_bounds = array<i64: 8, 32>}, {pipeline_mode = #tpu.pipeline_mode<synchronous>, transform_indices = @transform_2, window_bounds = array<i64: 1, 32>}, {pipeline_mode = #tpu.pipeline_mode<synchronous>, transform_indices = @transform_3, window_bounds = array<i64: 32, 32>}, {pipeline_mode = #tpu.pipeline_mode<synchronous>, transform_indices = @transform_4, window_bounds = array<i64: 1, 32>}, {pipeline_mode = #tpu.pipeline_mode<synchronous>, transform_indices = @transform_5, window_bounds = array<i64: 1, 32>}, {pipeline_mode = #tpu.pipeline_mode<synchronous>, transform_indices = @transform_6, window_bounds = array<i64: 1, 32>}, {pipeline_mode = #tpu.pipeline_mode<synchronous>, transform_indices = @transform_7, window_bounds = array<i64: 32, 32>}, {pipeline_mode = #tpu.pipeline_mode<synchronous>, transform_indices = @transform_8, window_bounds = array<i64: 1, 32>}, {pipeline_mode = #tpu.pipeline_mode<synchronous>, transform_indices = @transform_9, window_bounds = array<i64: 32, 32>}, {pipeline_mode = #tpu.pipeline_mode<synchronous>, transform_indices = @transform_10, window_bounds = array<i64: 1, 32>}, {pipeline_mode = #tpu.pipeline_mode<synchronous>, transform_indices = @transform_11, window_bounds = array<i64: 32, 32>}, {pipeline_mode = #tpu.pipeline_mode<synchronous>, transform_indices = @transform_12, window_bounds = array<i64: 1, 32>}, {pipeline_mode = #tpu.pipeline_mode<synchronous>, transform_indices = @transform_13, window_bounds = array<i64: 32, 32>}, {pipeline_mode = #tpu.pipeline_mode<synchronous>, transform_indices = @transform_14, window_bounds = array<i64: 1, 32>}, {transform_indices = @transform_15, window_bounds = array<i64: 8, 32>}]} {
    %c0 = arith.constant 0 : index
    %c0_0 = arith.constant 0 : index
    %0 = vector.load %arg1[%c0, %c0_0] : memref<8x8xbf16, #tpu.memory_space<vmem>>, vector<8x8xbf16>
    %c0_1 = arith.constant 0 : index
    %c0_2 = arith.constant 0 : index
    %1 = vector.load %arg2[%c0_1, %c0_2] : memref<8x32xbf16, #tpu.memory_space<vmem>>, vector<8x32xbf16>
    %cst = arith.constant dense<0.000000e+00> : vector<8x32xf32>
    %2 = tpu.matmul %0, %1, %cst {dimension_numbers = #tpu.dot_dimension_numbers<[1], [0], [0], [1], [0, 0, 1, 1], [], []>} : vector<8x8xbf16>, vector<8x32xbf16>, vector<8x32xf32> -> vector<8x32xf32>
    %c0_3 = arith.constant 0 : index
    %c0_4 = arith.constant 0 : index
    %3 = vector.load %arg3[%c0_3, %c0_4] : memref<1x32xf32, #tpu.memory_space<vmem>>, vector<1x32xf32>
    %4 = vector.broadcast %3 : vector<1x32xf32> to vector<8x32xf32>
    %5 = arith.addf %2, %4 : vector<8x32xf32>
    %cst_5 = arith.constant 0.000000e+00 : f32
    %6 = vector.broadcast %cst_5 : f32 to vector<8x32xf32>
    %7 = arith.maximumf %5, %6 : vector<8x32xf32>
    %8 = arith.truncf %7 : vector<8x32xf32> to vector<8x32xbf16>
    %c0_6 = arith.constant 0 : index
    %c0_7 = arith.constant 0 : index
    %9 = vector.load %arg4[%c0_6, %c0_7] : memref<32x32xbf16, #tpu.memory_space<vmem>>, vector<32x32xbf16>
    %cst_8 = arith.constant dense<0.000000e+00> : vector<8x32xf32>
    %10 = tpu.matmul %8, %9, %cst_8 {dimension_numbers = #tpu.dot_dimension_numbers<[1], [0], [0], [1], [0, 0, 1, 1], [], []>} : vector<8x32xbf16>, vector<32x32xbf16>, vector<8x32xf32> -> vector<8x32xf32>
    %c0_9 = arith.constant 0 : index
    %c0_10 = arith.constant 0 : index
    %11 = vector.load %arg5[%c0_9, %c0_10] : memref<1x32xf32, #tpu.memory_space<vmem>>, vector<1x32xf32>
    %12 = vector.broadcast %11 : vector<1x32xf32> to vector<8x32xf32>
    %13 = arith.addf %10, %12 : vector<8x32xf32>
    %cst_11 = arith.constant dense<0.000000e+00> : vector<8xf32>
    %14 = vector.multi_reduction <add>, %13, %cst_11 [1] : vector<8x32xf32> to vector<8xf32>
    %15 = vector.shape_cast %14 : vector<8xf32> to vector<8x1xf32>
    %cst_12 = arith.constant 3.200000e+01 : f32
    %16 = vector.broadcast %cst_12 : f32 to vector<8x1xf32>
    %17 = arith.divf %15, %16 : vector<8x1xf32>
    %18 = vector.broadcast %17 : vector<8x1xf32> to vector<8x32xf32>
    %19 = arith.subf %13, %18 : vector<8x32xf32>
    %20 = arith.mulf %19, %19 : vector<8x32xf32>
    %cst_13 = arith.constant dense<0.000000e+00> : vector<8xf32>
    %21 = vector.multi_reduction <add>, %20, %cst_13 [1] : vector<8x32xf32> to vector<8xf32>
    %22 = vector.shape_cast %21 : vector<8xf32> to vector<8x1xf32>
    %cst_14 = arith.constant 3.200000e+01 : f32
    %23 = vector.broadcast %cst_14 : f32 to vector<8x1xf32>
    %24 = arith.divf %22, %23 : vector<8x1xf32>
    %25 = vector.broadcast %17 : vector<8x1xf32> to vector<8x32xf32>
    %26 = arith.subf %13, %25 : vector<8x32xf32>
    %cst_15 = arith.constant 9.99999974E-6 : f32
    %27 = vector.broadcast %cst_15 : f32 to vector<8x1xf32>
    %28 = arith.addf %24, %27 : vector<8x1xf32>
    %29 = math.rsqrt %28 : vector<8x1xf32>
    %30 = vector.broadcast %29 : vector<8x1xf32> to vector<8x32xf32>
    %31 = arith.mulf %26, %30 : vector<8x32xf32>
    %c0_16 = arith.constant 0 : index
    %c0_17 = arith.constant 0 : index
    %32 = vector.load %arg6[%c0_16, %c0_17] : memref<1x32xf32, #tpu.memory_space<vmem>>, vector<1x32xf32>
    %33 = vector.broadcast %32 : vector<1x32xf32> to vector<8x32xf32>
    %34 = arith.mulf %31, %33 : vector<8x32xf32>
    %c0_18 = arith.constant 0 : index
    %c0_19 = arith.constant 0 : index
    %35 = vector.load %arg7[%c0_18, %c0_19] : memref<1x32xf32, #tpu.memory_space<vmem>>, vector<1x32xf32>
    %36 = vector.broadcast %35 : vector<1x32xf32> to vector<8x32xf32>
    %37 = arith.addf %34, %36 : vector<8x32xf32>
    %38 = arith.truncf %37 : vector<8x32xf32> to vector<8x32xbf16>
    %c0_20 = arith.constant 0 : index
    %c0_21 = arith.constant 0 : index
    %39 = vector.load %arg8[%c0_20, %c0_21] : memref<32x32xbf16, #tpu.memory_space<vmem>>, vector<32x32xbf16>
    %cst_22 = arith.constant dense<0.000000e+00> : vector<8x32xf32>
    %40 = tpu.matmul %38, %39, %cst_22 {dimension_numbers = #tpu.dot_dimension_numbers<[1], [0], [0], [1], [0, 0, 1, 1], [], []>} : vector<8x32xbf16>, vector<32x32xbf16>, vector<8x32xf32> -> vector<8x32xf32>
    %c0_23 = arith.constant 0 : index
    %c0_24 = arith.constant 0 : index
    %41 = vector.load %arg9[%c0_23, %c0_24] : memref<1x32xf32, #tpu.memory_space<vmem>>, vector<1x32xf32>
    %42 = vector.broadcast %41 : vector<1x32xf32> to vector<8x32xf32>
    %43 = arith.addf %40, %42 : vector<8x32xf32>
    %44 = arith.truncf %43 : vector<8x32xf32> to vector<8x32xbf16>
    %45 = vector.shape_cast %44 : vector<8x32xbf16> to vector<1x8x32xbf16>
    %c0_25 = arith.constant 0 : index
    %c0_26 = arith.constant 0 : index
    %46 = vector.load %arg10[%c0_25, %c0_26] : memref<32x32xbf16, #tpu.memory_space<vmem>>, vector<32x32xbf16>
    %cst_27 = arith.constant dense<0.000000e+00> : vector<8x32xf32>
    %47 = tpu.matmul %38, %46, %cst_27 {dimension_numbers = #tpu.dot_dimension_numbers<[1], [0], [0], [1], [0, 0, 1, 1], [], []>} : vector<8x32xbf16>, vector<32x32xbf16>, vector<8x32xf32> -> vector<8x32xf32>
    %c0_28 = arith.constant 0 : index
    %c0_29 = arith.constant 0 : index
    %48 = vector.load %arg11[%c0_28, %c0_29] : memref<1x32xf32, #tpu.memory_space<vmem>>, vector<1x32xf32>
    %49 = vector.broadcast %48 : vector<1x32xf32> to vector<8x32xf32>
    %50 = arith.addf %47, %49 : vector<8x32xf32>
    %51 = arith.truncf %50 : vector<8x32xf32> to vector<8x32xbf16>
    %52 = vector.shape_cast %51 : vector<8x32xbf16> to vector<1x8x32xbf16>
    %c0_30 = arith.constant 0 : index
    %c0_31 = arith.constant 0 : index
    %53 = vector.load %arg12[%c0_30, %c0_31] : memref<32x32xbf16, #tpu.memory_space<vmem>>, vector<32x32xbf16>
    %cst_32 = arith.constant dense<0.000000e+00> : vector<8x32xf32>
    %54 = tpu.matmul %38, %53, %cst_32 {dimension_numbers = #tpu.dot_dimension_numbers<[1], [0], [0], [1], [0, 0, 1, 1], [], []>} : vector<8x32xbf16>, vector<32x32xbf16>, vector<8x32xf32> -> vector<8x32xf32>
    %c0_33 = arith.constant 0 : index
    %c0_34 = arith.constant 0 : index
    %55 = vector.load %arg13[%c0_33, %c0_34] : memref<1x32xf32, #tpu.memory_space<vmem>>, vector<1x32xf32>
    %56 = vector.broadcast %55 : vector<1x32xf32> to vector<8x32xf32>
    %57 = arith.addf %54, %56 : vector<8x32xf32>
    %58 = arith.truncf %57 : vector<8x32xf32> to vector<8x32xbf16>
    %59 = vector.shape_cast %58 : vector<8x32xbf16> to vector<1x8x32xbf16>
    %60 = vector.extract_strided_slice %45 {offsets = [0, 0, 0], sizes = [1, 8, 4], strides = [1, 1, 1]} : vector<1x8x32xbf16> to vector<1x8x4xbf16>
    %61 = vector.extract_strided_slice %45 {offsets = [0, 0, 4], sizes = [1, 8, 4], strides = [1, 1, 1]} : vector<1x8x32xbf16> to vector<1x8x4xbf16>
    %62 = vector.extract_strided_slice %45 {offsets = [0, 0, 8], sizes = [1, 8, 4], strides = [1, 1, 1]} : vector<1x8x32xbf16> to vector<1x8x4xbf16>
    %63 = vector.extract_strided_slice %45 {offsets = [0, 0, 12], sizes = [1, 8, 4], strides = [1, 1, 1]} : vector<1x8x32xbf16> to vector<1x8x4xbf16>
    %64 = vector.extract_strided_slice %45 {offsets = [0, 0, 16], sizes = [1, 8, 4], strides = [1, 1, 1]} : vector<1x8x32xbf16> to vector<1x8x4xbf16>
    %65 = vector.extract_strided_slice %45 {offsets = [0, 0, 20], sizes = [1, 8, 4], strides = [1, 1, 1]} : vector<1x8x32xbf16> to vector<1x8x4xbf16>
    %66 = vector.extract_strided_slice %45 {offsets = [0, 0, 24], sizes = [1, 8, 4], strides = [1, 1, 1]} : vector<1x8x32xbf16> to vector<1x8x4xbf16>
    %67 = vector.extract_strided_slice %45 {offsets = [0, 0, 28], sizes = [1, 8, 4], strides = [1, 1, 1]} : vector<1x8x32xbf16> to vector<1x8x4xbf16>
    %68 = tpu.concatenate %60, %61, %62, %63, %64, %65, %66, %67 in 0 : vector<1x8x4xbf16>, vector<1x8x4xbf16>, vector<1x8x4xbf16>, vector<1x8x4xbf16>, vector<1x8x4xbf16>, vector<1x8x4xbf16>, vector<1x8x4xbf16>, vector<1x8x4xbf16> -> vector<8x8x4xbf16>
    %69 = vector.extract_strided_slice %52 {offsets = [0, 0, 0], sizes = [1, 8, 4], strides = [1, 1, 1]} : vector<1x8x32xbf16> to vector<1x8x4xbf16>
    %70 = vector.extract_strided_slice %52 {offsets = [0, 0, 4], sizes = [1, 8, 4], strides = [1, 1, 1]} : vector<1x8x32xbf16> to vector<1x8x4xbf16>
    %71 = vector.extract_strided_slice %52 {offsets = [0, 0, 8], sizes = [1, 8, 4], strides = [1, 1, 1]} : vector<1x8x32xbf16> to vector<1x8x4xbf16>
    %72 = vector.extract_strided_slice %52 {offsets = [0, 0, 12], sizes = [1, 8, 4], strides = [1, 1, 1]} : vector<1x8x32xbf16> to vector<1x8x4xbf16>
    %73 = vector.extract_strided_slice %52 {offsets = [0, 0, 16], sizes = [1, 8, 4], strides = [1, 1, 1]} : vector<1x8x32xbf16> to vector<1x8x4xbf16>
    %74 = vector.extract_strided_slice %52 {offsets = [0, 0, 20], sizes = [1, 8, 4], strides = [1, 1, 1]} : vector<1x8x32xbf16> to vector<1x8x4xbf16>
    %75 = vector.extract_strided_slice %52 {offsets = [0, 0, 24], sizes = [1, 8, 4], strides = [1, 1, 1]} : vector<1x8x32xbf16> to vector<1x8x4xbf16>
    %76 = vector.extract_strided_slice %52 {offsets = [0, 0, 28], sizes = [1, 8, 4], strides = [1, 1, 1]} : vector<1x8x32xbf16> to vector<1x8x4xbf16>
    %77 = tpu.concatenate %69, %70, %71, %72, %73, %74, %75, %76 in 0 : vector<1x8x4xbf16>, vector<1x8x4xbf16>, vector<1x8x4xbf16>, vector<1x8x4xbf16>, vector<1x8x4xbf16>, vector<1x8x4xbf16>, vector<1x8x4xbf16>, vector<1x8x4xbf16> -> vector<8x8x4xbf16>
    %78 = vector.extract_strided_slice %59 {offsets = [0, 0, 0], sizes = [1, 8, 4], strides = [1, 1, 1]} : vector<1x8x32xbf16> to vector<1x8x4xbf16>
    %79 = vector.extract_strided_slice %59 {offsets = [0, 0, 4], sizes = [1, 8, 4], strides = [1, 1, 1]} : vector<1x8x32xbf16> to vector<1x8x4xbf16>
    %80 = vector.extract_strided_slice %59 {offsets = [0, 0, 8], sizes = [1, 8, 4], strides = [1, 1, 1]} : vector<1x8x32xbf16> to vector<1x8x4xbf16>
    %81 = vector.extract_strided_slice %59 {offsets = [0, 0, 12], sizes = [1, 8, 4], strides = [1, 1, 1]} : vector<1x8x32xbf16> to vector<1x8x4xbf16>
    %82 = vector.extract_strided_slice %59 {offsets = [0, 0, 16], sizes = [1, 8, 4], strides = [1, 1, 1]} : vector<1x8x32xbf16> to vector<1x8x4xbf16>
    %83 = vector.extract_strided_slice %59 {offsets = [0, 0, 20], sizes = [1, 8, 4], strides = [1, 1, 1]} : vector<1x8x32xbf16> to vector<1x8x4xbf16>
    %84 = vector.extract_strided_slice %59 {offsets = [0, 0, 24], sizes = [1, 8, 4], strides = [1, 1, 1]} : vector<1x8x32xbf16> to vector<1x8x4xbf16>
    %85 = vector.extract_strided_slice %59 {offsets = [0, 0, 28], sizes = [1, 8, 4], strides = [1, 1, 1]} : vector<1x8x32xbf16> to vector<1x8x4xbf16>
    %86 = tpu.concatenate %78, %79, %80, %81, %82, %83, %84, %85 in 0 : vector<1x8x4xbf16>, vector<1x8x4xbf16>, vector<1x8x4xbf16>, vector<1x8x4xbf16>, vector<1x8x4xbf16>, vector<1x8x4xbf16>, vector<1x8x4xbf16>, vector<1x8x4xbf16> -> vector<8x8x4xbf16>
    "tpu.trace_start"() <{level = 10 : i32, message = "bmd,bnd->bmn"}> : () -> ()
    %cst_35 = arith.constant dense<0.000000e+00> : vector<8x8x8xf32>
    %87 = tpu.matmul %68, %77, %cst_35 {dimension_numbers = #tpu.dot_dimension_numbers<[2], [2], [1], [1], [0, 0, 0, 1, 1, 1], [0], [0]>} : vector<8x8x4xbf16>, vector<8x8x4xbf16>, vector<8x8x8xf32> -> vector<8x8x8xf32>
    "tpu.trace_stop"() : () -> ()
    %cst_36 = arith.constant 5.000000e-01 : f32
    %88 = vector.broadcast %cst_36 : f32 to vector<8x8x8xf32>
    %89 = arith.mulf %87, %88 : vector<8x8x8xf32>
    %90 = tpu.iota {dimensions = array<i32: 0>} : vector<8x8xi32>
    %91 = tpu.iota {dimensions = array<i32: 1>} : vector<8x8xi32>
    %92 = arith.cmpi eq, %90, %91 : vector<8x8xi32>
    %93 = vector.shape_cast %92 : vector<8x8xi1> to vector<1x8x8xi1>
    %cst_37 = arith.constant 0.000000e+00 : f32
    %94 = vector.shape_cast %93 : vector<1x8x8xi1> to vector<1x8x8xi1>
    %95 = vector.broadcast %94 : vector<1x8x8xi1> to vector<8x8x8xi1>
    %96 = vector.broadcast %cst_37 : f32 to vector<8x8x8xf32>
    %97 = arith.select %95, %96, %89 : vector<8x8x8xi1>, vector<8x8x8xf32>
    %cst_38 = arith.constant dense<0xFF800000> : vector<8x8xf32>
    %98 = vector.multi_reduction <maximumf>, %97, %cst_38 [2] : vector<8x8x8xf32> to vector<8x8xf32>
    %99 = vector.shape_cast %98 : vector<8x8xf32> to vector<8x8x1xf32>
    %100 = vector.broadcast %99 : vector<8x8x1xf32> to vector<8x8x8xf32>
    %101 = arith.subf %97, %100 : vector<8x8x8xf32>
    %102 = math.exp %101 : vector<8x8x8xf32>
    %cst_39 = arith.constant dense<0.000000e+00> : vector<8x8xf32>
    %103 = vector.multi_reduction <add>, %102, %cst_39 [2] : vector<8x8x8xf32> to vector<8x8xf32>
    %104 = vector.shape_cast %103 : vector<8x8xf32> to vector<8x8x1xf32>
    %105 = tpu.reciprocal %104 {approx = true} : vector<8x8x1xf32> -> vector<8x8x1xf32>
    %106 = vector.broadcast %105 : vector<8x8x1xf32> to vector<8x8x8xf32>
    %107 = arith.mulf %102, %106 : vector<8x8x8xf32>
    %108 = arith.truncf %107 : vector<8x8x8xf32> to vector<8x8x8xbf16>
    "tpu.trace_start"() <{level = 10 : i32, message = "bmn,bnd->bmd"}> : () -> ()
    %cst_40 = arith.constant dense<0.000000e+00> : vector<8x8x4xf32>
    %109 = tpu.matmul %108, %86, %cst_40 {dimension_numbers = #tpu.dot_dimension_numbers<[2], [1], [1], [2], [0, 0, 0, 1, 1, 2], [0], [0]>} : vector<8x8x8xbf16>, vector<8x8x4xbf16>, vector<8x8x4xf32> -> vector<8x8x4xf32>
    "tpu.trace_stop"() : () -> ()
    %110 = vector.extract_strided_slice %109 {offsets = [0, 0, 0], sizes = [1, 8, 4], strides = [1, 1, 1]} : vector<8x8x4xf32> to vector<1x8x4xf32>
    %111 = vector.extract_strided_slice %109 {offsets = [1, 0, 0], sizes = [1, 8, 4], strides = [1, 1, 1]} : vector<8x8x4xf32> to vector<1x8x4xf32>
    %112 = vector.extract_strided_slice %109 {offsets = [2, 0, 0], sizes = [1, 8, 4], strides = [1, 1, 1]} : vector<8x8x4xf32> to vector<1x8x4xf32>
    %113 = vector.extract_strided_slice %109 {offsets = [3, 0, 0], sizes = [1, 8, 4], strides = [1, 1, 1]} : vector<8x8x4xf32> to vector<1x8x4xf32>
    %114 = vector.extract_strided_slice %109 {offsets = [4, 0, 0], sizes = [1, 8, 4], strides = [1, 1, 1]} : vector<8x8x4xf32> to vector<1x8x4xf32>
    %115 = vector.extract_strided_slice %109 {offsets = [5, 0, 0], sizes = [1, 8, 4], strides = [1, 1, 1]} : vector<8x8x4xf32> to vector<1x8x4xf32>
    %116 = vector.extract_strided_slice %109 {offsets = [6, 0, 0], sizes = [1, 8, 4], strides = [1, 1, 1]} : vector<8x8x4xf32> to vector<1x8x4xf32>
    %117 = vector.extract_strided_slice %109 {offsets = [7, 0, 0], sizes = [1, 8, 4], strides = [1, 1, 1]} : vector<8x8x4xf32> to vector<1x8x4xf32>
    %118 = tpu.concatenate %110, %111, %112, %113, %114, %115, %116, %117 in 2 : vector<1x8x4xf32>, vector<1x8x4xf32>, vector<1x8x4xf32>, vector<1x8x4xf32>, vector<1x8x4xf32>, vector<1x8x4xf32>, vector<1x8x4xf32>, vector<1x8x4xf32> -> vector<1x8x32xf32>
    %119 = vector.shape_cast %118 : vector<1x8x32xf32> to vector<8x32xf32>
    %120 = arith.truncf %119 : vector<8x32xf32> to vector<8x32xbf16>
    %c0_41 = arith.constant 0 : index
    %c0_42 = arith.constant 0 : index
    %121 = vector.load %arg14[%c0_41, %c0_42] : memref<32x32xbf16, #tpu.memory_space<vmem>>, vector<32x32xbf16>
    %cst_43 = arith.constant dense<0.000000e+00> : vector<8x32xf32>
    %122 = tpu.matmul %120, %121, %cst_43 {dimension_numbers = #tpu.dot_dimension_numbers<[1], [0], [0], [1], [0, 0, 1, 1], [], []>} : vector<8x32xbf16>, vector<32x32xbf16>, vector<8x32xf32> -> vector<8x32xf32>
    %c0_44 = arith.constant 0 : index
    %c0_45 = arith.constant 0 : index
    %123 = vector.load %arg15[%c0_44, %c0_45] : memref<1x32xf32, #tpu.memory_space<vmem>>, vector<1x32xf32>
    %124 = vector.broadcast %123 : vector<1x32xf32> to vector<8x32xf32>
    %125 = arith.addf %122, %124 : vector<8x32xf32>
    %126 = arith.addf %125, %13 : vector<8x32xf32>
    %c0_46 = arith.constant 0 : index
    %c0_47 = arith.constant 0 : index
    %127 = vector.load %arg16[%c0_46, %c0_47] : memref<8x32xf32, #tpu.memory_space<vmem>>, vector<8x32xf32>
    tpu.vector_store %arg16[%c0_46, %c0_47], %126 {strides = array<i32>} : memref<8x32xf32, #tpu.memory_space<vmem>>, vector<8x32xf32>,
    return
  }
  func.func @transform_0(%arg0: i32) -> (i32, i32) {
    %c0_i32 = arith.constant 0 : i32
    %c0_i32_0 = arith.constant 0 : i32
    return %arg0, %c0_i32 : i32, i32
  }
  func.func @transform_1(%arg0: i32) -> (i32, i32) {
    %c0_i32 = arith.constant 0 : i32
    %c0_i32_0 = arith.constant 0 : i32
    %c0_i32_1 = arith.constant 0 : i32
    return %c0_i32, %c0_i32_0 : i32, i32
  }
  func.func @transform_2(%arg0: i32) -> (i32, i32) {
    %c0_i32 = arith.constant 0 : i32
    %c0_i32_0 = arith.constant 0 : i32
    %c0_i32_1 = arith.constant 0 : i32
    return %c0_i32, %c0_i32_0 : i32, i32
  }
  func.func @transform_3(%arg0: i32) -> (i32, i32) {
    %c0_i32 = arith.constant 0 : i32
    %c0_i32_0 = arith.constant 0 : i32
    %c0_i32_1 = arith.constant 0 : i32
    return %c0_i32, %c0_i32_0 : i32, i32
  }
  func.func @transform_4(%arg0: i32) -> (i32, i32) {
    %c0_i32 = arith.constant 0 : i32
    %c0_i32_0 = arith.constant 0 : i32
    %c0_i32_1 = arith.constant 0 : i32
    return %c0_i32, %c0_i32_0 : i32, i32
  }
  func.func @transform_5(%arg0: i32) -> (i32, i32) {
    %c0_i32 = arith.constant 0 : i32
    %c0_i32_0 = arith.constant 0 : i32
    %c0_i32_1 = arith.constant 0 : i32
    return %c0_i32, %c0_i32_0 : i32, i32
  }
  func.func @transform_6(%arg0: i32) -> (i32, i32) {
    %c0_i32 = arith.constant 0 : i32
    %c0_i32_0 = arith.constant 0 : i32
    %c0_i32_1 = arith.constant 0 : i32
    return %c0_i32, %c0_i32_0 : i32, i32
  }
  func.func @transform_7(%arg0: i32) -> (i32, i32) {
    %c0_i32 = arith.constant 0 : i32
    %c0_i32_0 = arith.constant 0 : i32
    %c0_i32_1 = arith.constant 0 : i32
    return %c0_i32, %c0_i32_0 : i32, i32
  }
  func.func @transform_8(%arg0: i32) -> (i32, i32) {
    %c0_i32 = arith.constant 0 : i32
    %c0_i32_0 = arith.constant 0 : i32
    %c0_i32_1 = arith.constant 0 : i32
    return %c0_i32, %c0_i32_0 : i32, i32
  }
  func.func @transform_9(%arg0: i32) -> (i32, i32) {
    %c0_i32 = arith.constant 0 : i32
    %c0_i32_0 = arith.constant 0 : i32
    %c0_i32_1 = arith.constant 0 : i32
    return %c0_i32, %c0_i32_0 : i32, i32
  }
  func.func @transform_10(%arg0: i32) -> (i32, i32) {
    %c0_i32 = arith.constant 0 : i32
    %c0_i32_0 = arith.constant 0 : i32
    %c0_i32_1 = arith.constant 0 : i32
    return %c0_i32, %c0_i32_0 : i32, i32
  }
  func.func @transform_11(%arg0: i32) -> (i32, i32) {
    %c0_i32 = arith.constant 0 : i32
    %c0_i32_0 = arith.constant 0 : i32
    %c0_i32_1 = arith.constant 0 : i32
    return %c0_i32, %c0_i32_0 : i32, i32
  }
  func.func @transform_12(%arg0: i32) -> (i32, i32) {
    %c0_i32 = arith.constant 0 : i32
    %c0_i32_0 = arith.constant 0 : i32
    %c0_i32_1 = arith.constant 0 : i32
    return %c0_i32, %c0_i32_0 : i32, i32
  }
  func.func @transform_13(%arg0: i32) -> (i32, i32) {
    %c0_i32 = arith.constant 0 : i32
    %c0_i32_0 = arith.constant 0 : i32
    %c0_i32_1 = arith.constant 0 : i32
    return %c0_i32, %c0_i32_0 : i32, i32
  }
  func.func @transform_14(%arg0: i32) -> (i32, i32) {
    %c0_i32 = arith.constant 0 : i32
    %c0_i32_0 = arith.constant 0 : i32
    %c0_i32_1 = arith.constant 0 : i32
    return %c0_i32, %c0_i32_0 : i32, i32
  }
  func.func @transform_15(%arg0: i32) -> (i32, i32) {
    %c0_i32 = arith.constant 0 : i32
    %c0_i32_0 = arith.constant 0 : i32
    return %arg0, %c0_i32 : i32, i32
  }
}

</mosaic_0001>

<llo_original>
// kernel: tpu_custom_call.1
$region0: #{tpu_custom_call.1}
  #allocation0 [shape = 'u32[]', space=smem, size = 0x4, offset = 0x4, fixed_abs, tag = 'smem constant byte address 0x4 - core index']
  #allocation1 [shape = 'u32[144,128]{1,0:T(1,128)}', space=vmem, size = 0x12000, scoped, tag = 'internal scratch']
  %s0 = inlined_call_operand.vmem [shape: bf16[16,8], index: 0, kind: input, shape index: {}]
  %s1 = inlined_call_operand.hbm [shape: bf16[8,32], index: 1, kind: input, shape index: {}]
  %s2 = inlined_call_operand.vmem [shape: f32[1,32], index: 2, kind: input, shape index: {}]
  %s3 = inlined_call_operand.vmem [shape: bf16[32,32], index: 3, kind: input, shape index: {}]
  %s4 = inlined_call_operand.hbm [shape: f32[1,32], index: 4, kind: input, shape index: {}]
  %s5 = inlined_call_operand.hbm [shape: f32[1,32], index: 5, kind: input, shape index: {}]
  %s6 = inlined_call_operand.hbm [shape: f32[1,32], index: 6, kind: input, shape index: {}]
  %s7 = inlined_call_operand.vmem [shape: bf16[32,32], index: 7, kind: input, shape index: {}]
  %s8 = inlined_call_operand.hbm [shape: f32[1,32], index: 8, kind: input, shape index: {}]
  %s9 = inlined_call_operand.hbm [shape: bf16[32,32], index: 9, kind: input, shape index: {}]
  %s10 = inlined_call_operand.hbm [shape: f32[1,32], index: 10, kind: input, shape index: {}]
  %s11 = inlined_call_operand.vmem [shape: bf16[32,32], index: 11, kind: input, shape index: {}]
  %s12 = inlined_call_operand.vmem [shape: f32[1,32], index: 12, kind: input, shape index: {}]
  %s13 = inlined_call_operand.hbm [shape: bf16[32,32], index: 13, kind: input, shape index: {}]
  %s14 = inlined_call_operand.vmem [shape: f32[1,32], index: 14, kind: input, shape index: {}]
  %s15 = inlined_call_operand.hbm [shape: f32[16,32], index: 15, kind: output, shape index: {}]
  %s16 = sld [smem:[#allocation0]]
  $region125: #{tpu_custom_call.1} parent=0
    _
  %s18 = ssub.s32 1, %s16
  %s19 = scalar_select 0, %s18, %s16
  $region1: #{tpu_custom_call.1} parent=0
    #allocation2 [shape = 'u8[2048]{0}', space=vmem, size = 0x800, scoped, tag = 'input window, operand 1, single buffered']
    #allocation3 [shape = 's32[2]{0}', space=sflag, size = 0x8, scoped, tag = 'scoped memory for tpu_custom_call.1']
    #allocation4 [shape = 's32[2]{0}', space=sflag, size = 0x8, scoped, tag = 'scoped memory for tpu_custom_call.1']
    #allocation5 [shape = 'u8[512]{0}', space=vmem, size = 0x400, scoped, tag = 'input window, operand 4, single buffered']
    #allocation6 [shape = 's32[1]{0}', space=sflag, size = 0x4, scoped, tag = 'scoped memory for tpu_custom_call.1']
    #allocation7 [shape = 'u8[512]{0}', space=vmem, size = 0x400, scoped, tag = 'input window, operand 5, single buffered']
    #allocation8 [shape = 'u8[512]{0}', space=vmem, size = 0x400, scoped, tag = 'input window, operand 6, single buffered']
    #allocation9 [shape = 's32[1]{0}', space=sflag, size = 0x4, scoped, tag = 'scoped memory for tpu_custom_call.1']
    #allocation10 [shape = 'u8[512]{0}', space=vmem, size = 0x400, scoped, tag = 'input window, operand 8, single buffered']
    #allocation11 [shape = 'u8[8192]{0}', space=vmem, size = 0x2000, scoped, tag = 'input window, operand 9, single buffered']
    #allocation12 [shape = 's32[1]{0}', space=sflag, size = 0x4, scoped, tag = 'scoped memory for tpu_custom_call.1']
    #allocation13 [shape = 'u8[512]{0}', space=vmem, size = 0x400, scoped, tag = 'input window, operand 10, single buffered']
    #allocation14 [shape = 'u8[8192]{0}', space=vmem, size = 0x2000, scoped, tag = 'input window, operand 13, single buffered']
    #allocation15 [shape = 's32[1]{0}', space=sflag, size = 0x4, scoped, tag = 'scoped memory for tpu_custom_call.1']
    #allocation16 [shape = 'u8[8192]{0}', space=vmem, size = 0x2000, scoped, tag = 'output window, operand 0']
    %20 = vsyncpa [#allocation3], 0
    %21 = vsyncpa [#allocation6], 0
    %22 = vsyncpa [#allocation9], 0
    %23 = vsyncpa [#allocation12], 0
    %24 = vsyncpa [#allocation15], 0
    %25 = vsyncpa [#allocation4], 0
    %s26 = scalar_lea.sflag [#allocation4], 1
    %27 = vsyncpa %s26, 0
    loop: start=0, step=1, limit=4
    $region2: #{tpu_custom_call.1} parent=1 // loop_pre_header
      _
    $region3: #{tpu_custom_call.1} parent=1 // loop_header
      %s29 = sphi 0, %s33
      %p30 = scmp.ge.s32.totalorder %s29, 4
      %s39 = sphi 0, %s41
      %s42 = sphi 0, %s39
      %s43 = sphi 0, %s42
      %s59 = sphi 0, %s43
      %s63 = sphi 0, %s63
      %s65 = sphi 0, %s63
      %s66 = sphi 0, %s65
      %s80 = sphi 0, %s66
      %s84 = sphi 0, %s84
      %s86 = sphi 0, %s84
      %s87 = sphi 0, %s86
      %s101 = sphi 0, %s87
      %s105 = sphi 0, %s105
      %s107 = sphi 0, %s105
      %s108 = sphi 0, %s107
      %s122 = sphi 0, %s108
      %s126 = sphi 0, %s126
      %s128 = sphi 0, %s126
      %s129 = sphi 0, %s128
      %s143 = sphi 0, %s129
      %s147 = sphi 0, %s147
      %s149 = sphi 0, %s147
      %s150 = sphi 0, %s149
      %s164 = sphi 0, %s150
      %s168 = sphi 0, %s168
      %s170 = sphi 0, %s168
      %s171 = sphi 0, %s170
      %s185 = sphi 0, %s171
      %s189 = sphi 0, %s189
      %s191 = sphi 0, %s189
      %s192 = sphi 0, %s191
      %s206 = sphi 0, %s192
      %s210 = sphi 0, %s210
      %s212 = sphi 0, %s210
      %s213 = sphi 0, %s212
      %s227 = sphi 0, %s213
      %s231 = sphi 0, %s231
      %s233 = sphi 0, %s231
      %s234 = sphi 0, %s233
      %s248 = sphi 0, %s234
      %s252 = sphi 0, %s252
      %s254 = sphi 0, %s252
      %s255 = sphi 0, %s254
      %s269 = sphi 0, %s255
      %s273 = sphi 0, %s273
      %s275 = sphi 0, %s273
      %s276 = sphi 0, %s275
      %s290 = sphi 0, %s276
      %s294 = sphi 0, %s294
      %s296 = sphi 0, %s294
      %s297 = sphi 0, %s296
      %s311 = sphi 0, %s297
      %s315 = sphi 0, %s315
      %s317 = sphi 0, %s315
      %s318 = sphi 0, %s317
      %s332 = sphi 0, %s318
      %s336 = sphi 0, %s336
      %s338 = sphi 0, %s336
      %s339 = sphi 0, %s338
      %s353 = sphi 0, %s339
      %s359 = sphi 0, %s361
      %s362 = sphi 0, %s359
      %s363 = sphi 0, %s362
      %s379 = sphi 0, %s363
    $region4: #{tpu_custom_call.1} parent=1 // loop_header_branch
      %32 = sbr.rel (%p30) target = $region8
    $region5: #{tpu_custom_call.1} parent=1 // loop_body
      %s34 = ssub.s32 %s29, 1
      %s35 = ssub.s32 %s29, 2
      %s36 = sadd.s32 %s29, 1
      %s37 = ssub.s32 %s29, %s36
      %p38 = scmp.eq.s32.totalorder %s37, 0
      %s40 = sadd.s32 %s39, 1
      %s41 = scalar_select %p38, %s39, %s40
      %p44 = pneg %p38
      %p45 = scmp.eq.s32.totalorder %s29, 1
      %p46 = por %p44, %p45
      %p47 = scmp.ne.s32.totalorder %s39, %s42
      %p48 = scmp.eq.s32.totalorder %s29, 0
      %p49 = por %p47, %p48
      %p50 = scmp.ne.s32.totalorder %s39, %s42
      %p51 = scmp.eq.s32.totalorder %s34, 1
      %p52 = por %p50, %p51
      %p53 = scmp.ne.s32.totalorder %s42, %s43
      %p54 = scmp.eq.s32.totalorder %s34, 0
      %p55 = por %p53, %p54
      %p56 = scmp.ne.s32.totalorder %s42, %s43
      %p57 = scmp.eq.s32.totalorder %s35, 1
      %p58 = por %p56, %p57
      %p60 = scmp.ne.s32.totalorder %s43, %s59
      %p61 = scmp.eq.s32.totalorder %s35, 0
      %p62 = por %p60, %p61
      %s64 = sadd.s32 %s63, 1
      %p67 = scmp.eq.s32.totalorder %s29, 1
      %p68 = scmp.ne.s32.totalorder %s63, %s65
      %p69 = scmp.eq.s32.totalorder %s29, 0
      %p70 = por %p68, %p69
      %p71 = scmp.ne.s32.totalorder %s63, %s65
      %p72 = scmp.eq.s32.totalorder %s34, 1
      %p73 = por %p71, %p72
      %p74 = scmp.ne.s32.totalorder %s65, %s66
      %p75 = scmp.eq.s32.totalorder %s34, 0
      %p76 = por %p74, %p75
      %p77 = scmp.ne.s32.totalorder %s65, %s66
      %p78 = scmp.eq.s32.totalorder %s35, 1
      %p79 = por %p77, %p78
      %p81 = scmp.ne.s32.totalorder %s66, %s80
      %p82 = scmp.eq.s32.totalorder %s35, 0
      %p83 = por %p81, %p82
      %s85 = sadd.s32 %s84, 1
      %p88 = scmp.eq.s32.totalorder %s29, 1
      %p89 = scmp.ne.s32.totalorder %s84, %s86
      %p90 = scmp.eq.s32.totalorder %s29, 0
      %p91 = por %p89, %p90
      %p92 = scmp.ne.s32.totalorder %s84, %s86
      %p93 = scmp.eq.s32.totalorder %s34, 1
      %p94 = por %p92, %p93
      %p95 = scmp.ne.s32.totalorder %s86, %s87
      %p96 = scmp.eq.s32.totalorder %s34, 0
      %p97 = por %p95, %p96
      %p98 = scmp.ne.s32.totalorder %s86, %s87
      %p99 = scmp.eq.s32.totalorder %s35, 1
      %p100 = por %p98, %p99
      %p102 = scmp.ne.s32.totalorder %s87, %s101
      %p103 = scmp.eq.s32.totalorder %s35, 0
      %p104 = por %p102, %p103
      %s106 = sadd.s32 %s105, 1
      %p109 = scmp.eq.s32.totalorder %s29, 1
      %p110 = scmp.ne.s32.totalorder %s105, %s107
      %p111 = scmp.eq.s32.totalorder %s29, 0
      %p112 = por %p110, %p111
      %p113 = scmp.ne.s32.totalorder %s105, %s107
      %p114 = scmp.eq.s32.totalorder %s34, 1
      %p115 = por %p113, %p114
      %p116 = scmp.ne.s32.totalorder %s107, %s108
      %p117 = scmp.eq.s32.totalorder %s34, 0
      %p118 = por %p116, %p117
      %p119 = scmp.ne.s32.totalorder %s107, %s108
      %p120 = scmp.eq.s32.totalorder %s35, 1
      %p121 = por %p119, %p120
      %p123 = scmp.ne.s32.totalorder %s108, %s122
      %p124 = scmp.eq.s32.totalorder %s35, 0
      %p125 = por %p123, %p124
      %s127 = sadd.s32 %s126, 1
      %p130 = scmp.eq.s32.totalorder %s29, 1
      %p131 = scmp.ne.s32.totalorder %s126, %s128
      %p132 = scmp.eq.s32.totalorder %s29, 0
      %p133 = por %p131, %p132
      %p134 = scmp.ne.s32.totalorder %s126, %s128
      %p135 = scmp.eq.s32.totalorder %s34, 1
      %p136 = por %p134, %p135
      %p137 = scmp.ne.s32.totalorder %s128, %s129
      %p138 = scmp.eq.s32.totalorder %s34, 0
      %p139 = por %p137, %p138
      %p140 = scmp.ne.s32.totalorder %s128, %s129
      %p141 = scmp.eq.s32.totalorder %s35, 1
      %p142 = por %p140, %p141
      %p144 = scmp.ne.s32.totalorder %s129, %s143
      %p145 = scmp.eq.s32.totalorder %s35, 0
      %p146 = por %p144, %p145
      %s148 = sadd.s32 %s147, 1
      %p151 = scmp.eq.s32.totalorder %s29, 1
      %p152 = scmp.ne.s32.totalorder %s147, %s149
      %p153 = scmp.eq.s32.totalorder %s29, 0
      %p154 = por %p152, %p153
      %p155 = scmp.ne.s32.totalorder %s147, %s149
      %p156 = scmp.eq.s32.totalorder %s34, 1
      %p157 = por %p155, %p156
      %p158 = scmp.ne.s32.totalorder %s149, %s150
      %p159 = scmp.eq.s32.totalorder %s34, 0
      %p160 = por %p158, %p159
      %p161 = scmp.ne.s32.totalorder %s149, %s150
      %p162 = scmp.eq.s32.totalorder %s35, 1
      %p163 = por %p161, %p162
      %p165 = scmp.ne.s32.totalorder %s150, %s164
      %p166 = scmp.eq.s32.totalorder %s35, 0
      %p167 = por %p165, %p166
      %s169 = sadd.s32 %s168, 1
      %p172 = scmp.eq.s32.totalorder %s29, 1
      %p173 = scmp.ne.s32.totalorder %s168, %s170
      %p174 = scmp.eq.s32.totalorder %s29, 0
      %p175 = por %p173, %p174
      %p176 = scmp.ne.s32.totalorder %s168, %s170
      %p177 = scmp.eq.s32.totalorder %s34, 1
      %p178 = por %p176, %p177
      %p179 = scmp.ne.s32.totalorder %s170, %s171
      %p180 = scmp.eq.s32.totalorder %s34, 0
      %p181 = por %p179, %p180
      %p182 = scmp.ne.s32.totalorder %s170, %s171
      %p183 = scmp.eq.s32.totalorder %s35, 1
      %p184 = por %p182, %p183
      %p186 = scmp.ne.s32.totalorder %s171, %s185
      %p187 = scmp.eq.s32.totalorder %s35, 0
      %p188 = por %p186, %p187
      %s190 = sadd.s32 %s189, 1
      %p193 = scmp.eq.s32.totalorder %s29, 1
      %p194 = scmp.ne.s32.totalorder %s189, %s191
      %p195 = scmp.eq.s32.totalorder %s29, 0
      %p196 = por %p194, %p195
      %p197 = scmp.ne.s32.totalorder %s189, %s191
      %p198 = scmp.eq.s32.totalorder %s34, 1
      %p199 = por %p197, %p198
      %p200 = scmp.ne.s32.totalorder %s191, %s192
      %p201 = scmp.eq.s32.totalorder %s34, 0
      %p202 = por %p200, %p201
      %p203 = scmp.ne.s32.totalorder %s191, %s192
      %p204 = scmp.eq.s32.totalorder %s35, 1
      %p205 = por %p203, %p204
      %p207 = scmp.ne.s32.totalorder %s192, %s206
      %p208 = scmp.eq.s32.totalorder %s35, 0
      %p209 = por %p207, %p208
      %s211 = sadd.s32 %s210, 1
      %p214 = scmp.eq.s32.totalorder %s29, 1
      %p215 = scmp.ne.s32.totalorder %s210, %s212
      %p216 = scmp.eq.s32.totalorder %s29, 0
      %p217 = por %p215, %p216
      %p218 = scmp.ne.s32.totalorder %s210, %s212
      %p219 = scmp.eq.s32.totalorder %s34, 1
      %p220 = por %p218, %p219
      %p221 = scmp.ne.s32.totalorder %s212, %s213
      %p222 = scmp.eq.s32.totalorder %s34, 0
      %p223 = por %p221, %p222
      %p224 = scmp.ne.s32.totalorder %s212, %s213
      %p225 = scmp.eq.s32.totalorder %s35, 1
      %p226 = por %p224, %p225
      %p228 = scmp.ne.s32.totalorder %s213, %s227
      %p229 = scmp.eq.s32.totalorder %s35, 0
      %p230 = por %p228, %p229
      %s232 = sadd.s32 %s231, 1
      %p235 = scmp.eq.s32.totalorder %s29, 1
      %p236 = scmp.ne.s32.totalorder %s231, %s233
      %p237 = scmp.eq.s32.totalorder %s29, 0
      %p238 = por %p236, %p237
      %p239 = scmp.ne.s32.totalorder %s231, %s233
      %p240 = scmp.eq.s32.totalorder %s34, 1
      %p241 = por %p239, %p240
      %p242 = scmp.ne.s32.totalorder %s233, %s234
      %p243 = scmp.eq.s32.totalorder %s34, 0
      %p244 = por %p242, %p243
      %p245 = scmp.ne.s32.totalorder %s233, %s234
      %p246 = scmp.eq.s32.totalorder %s35, 1
      %p247 = por %p245, %p246
      %p249 = scmp.ne.s32.totalorder %s234, %s248
      %p250 = scmp.eq.s32.totalorder %s35, 0
      %p251 = por %p249, %p250
      %s253 = sadd.s32 %s252, 1
      %p256 = scmp.eq.s32.totalorder %s29, 1
      %p257 = scmp.ne.s32.totalorder %s252, %s254
      %p258 = scmp.eq.s32.totalorder %s29, 0
      %p259 = por %p257, %p258
      %p260 = scmp.ne.s32.totalorder %s252, %s254
      %p261 = scmp.eq.s32.totalorder %s34, 1
      %p262 = por %p260, %p261
      %p263 = scmp.ne.s32.totalorder %s254, %s255
      %p264 = scmp.eq.s32.totalorder %s34, 0
      %p265 = por %p263, %p264
      %p266 = scmp.ne.s32.totalorder %s254, %s255
      %p267 = scmp.eq.s32.totalorder %s35, 1
      %p268 = por %p266, %p267
      %p270 = scmp.ne.s32.totalorder %s255, %s269
      %p271 = scmp.eq.s32.totalorder %s35, 0
      %p272 = por %p270, %p271
      %s274 = sadd.s32 %s273, 1
      %p277 = scmp.eq.s32.totalorder %s29, 1
      %p278 = scmp.ne.s32.totalorder %s273, %s275
      %p279 = scmp.eq.s32.totalorder %s29, 0
      %p280 = por %p278, %p279
      %p281 = scmp.ne.s32.totalorder %s273, %s275
      %p282 = scmp.eq.s32.totalorder %s34, 1
      %p283 = por %p281, %p282
      %p284 = scmp.ne.s32.totalorder %s275, %s276
      %p285 = scmp.eq.s32.totalorder %s34, 0
      %p286 = por %p284, %p285
      %p287 = scmp.ne.s32.totalorder %s275, %s276
      %p288 = scmp.eq.s32.totalorder %s35, 1
      %p289 = por %p287, %p288
      %p291 = scmp.ne.s32.totalorder %s276, %s290
      %p292 = scmp.eq.s32.totalorder %s35, 0
      %p293 = por %p291, %p292
      %s295 = sadd.s32 %s294, 1
      %p298 = scmp.eq.s32.totalorder %s29, 1
      %p299 = scmp.ne.s32.totalorder %s294, %s296
      %p300 = scmp.eq.s32.totalorder %s29, 0
      %p301 = por %p299, %p300
      %p302 = scmp.ne.s32.totalorder %s294, %s296
      %p303 = scmp.eq.s32.totalorder %s34, 1
      %p304 = por %p302, %p303
      %p305 = scmp.ne.s32.totalorder %s296, %s297
      %p306 = scmp.eq.s32.totalorder %s34, 0
      %p307 = por %p305, %p306
      %p308 = scmp.ne.s32.totalorder %s296, %s297
      %p309 = scmp.eq.s32.totalorder %s35, 1
      %p310 = por %p308, %p309
      %p312 = scmp.ne.s32.totalorder %s297, %s311
      %p313 = scmp.eq.s32.totalorder %s35, 0
      %p314 = por %p312, %p313
      %s316 = sadd.s32 %s315, 1
      %p319 = scmp.eq.s32.totalorder %s29, 1
      %p320 = scmp.ne.s32.totalorder %s315, %s317
      %p321 = scmp.eq.s32.totalorder %s29, 0
      %p322 = por %p320, %p321
      %p323 = scmp.ne.s32.totalorder %s315, %s317
      %p324 = scmp.eq.s32.totalorder %s34, 1
      %p325 = por %p323, %p324
      %p326 = scmp.ne.s32.totalorder %s317, %s318
      %p327 = scmp.eq.s32.totalorder %s34, 0
      %p328 = por %p326, %p327
      %p329 = scmp.ne.s32.totalorder %s317, %s318
      %p330 = scmp.eq.s32.totalorder %s35, 1
      %p331 = por %p329, %p330
      %p333 = scmp.ne.s32.totalorder %s318, %s332
      %p334 = scmp.eq.s32.totalorder %s35, 0
      %p335 = por %p333, %p334
      %s337 = sadd.s32 %s336, 1
      %p340 = scmp.eq.s32.totalorder %s29, 1
      %p341 = scmp.ne.s32.totalorder %s336, %s338
      %p342 = scmp.eq.s32.totalorder %s29, 0
      %p343 = por %p341, %p342
      %p344 = scmp.ne.s32.totalorder %s336, %s338
      %p345 = scmp.eq.s32.totalorder %s34, 1
      %p346 = por %p344, %p345
      %p347 = scmp.ne.s32.totalorder %s338, %s339
      %p348 = scmp.eq.s32.totalorder %s34, 0
      %p349 = por %p347, %p348
      %p350 = scmp.ne.s32.totalorder %s338, %s339
      %p351 = scmp.eq.s32.totalorder %s35, 1
      %p352 = por %p350, %p351
      %p354 = scmp.ne.s32.totalorder %s339, %s353
      %p355 = scmp.eq.s32.totalorder %s35, 0
      %p356 = por %p354, %p355
      %s357 = ssub.s32 %s29, %s36
      %p358 = scmp.eq.s32.totalorder %s357, 0
      %s360 = sadd.s32 %s359, 1
      %s361 = scalar_select %p358, %s359, %s360
      %p364 = pneg %p358
      %p365 = scmp.eq.s32.totalorder %s29, 1
      %p366 = por %p364, %p365
      %p367 = scmp.ne.s32.totalorder %s359, %s362
      %p368 = scmp.eq.s32.totalorder %s29, 0
      %p369 = por %p367, %p368
      %p370 = scmp.ne.s32.totalorder %s359, %s362
      %p371 = scmp.eq.s32.totalorder %s34, 1
      %p372 = por %p370, %p371
      %p373 = scmp.ne.s32.totalorder %s362, %s363
      %p374 = scmp.eq.s32.totalorder %s34, 0
      %p375 = por %p373, %p374
      %p376 = scmp.ne.s32.totalorder %s362, %s363
      %p377 = scmp.eq.s32.totalorder %s35, 1
      %p378 = por %p376, %p377
      %p380 = scmp.ne.s32.totalorder %s363, %s379
      %p381 = scmp.eq.s32.totalorder %s35, 0
      %p382 = por %p380, %p381
      %p383 = scmp.le.s32.totalorder 1, %s29
      %p384 = scmp.lt.s32.totalorder %s29, 3
      %p385 = pnand %p383, %p384
      %p386 = pneg %p385
      // Predicated region
      $region9: #{tpu_custom_call.1} parent=5 // pred_check
        _
      $region10: #{tpu_custom_call.1} parent=5 // pred_check_branch
        %388 = sbr.rel (%p385) target = $region12
      $region11: #{tpu_custom_call.1} parent=5 // pred_region
        %s389 = ssub.s32 %s29, 1
        // Predicated region
        $region13: #{tpu_custom_call.1} parent=11 // pred_check
          %p390 = pneg %p76
        $region14: #{tpu_custom_call.1} parent=11 // pred_check_branch
          %392 = sbr.rel (%p390) target = $region16
        $region15: #{tpu_custom_call.1} parent=11 // pred_region
          %s394 = ssub.s32 64, 64
          %395 = vsyncadd [#allocation3], %s394
          %s397 = sshll.u32 [#allocation2], 4
          %s398 = int_to_ptr.vmem [resolvable:$true] %s397
          %400 = dma.hbm_to_vmem [thread:$0]  %s1, 64, %s398, [#allocation3]
        $region16: #{tpu_custom_call.1} parent=11 // pred_fallthru
          _
        // Predicated region
        $region17: #{tpu_custom_call.1} parent=11 // pred_check
          %p401 = pneg %p97
        $region18: #{tpu_custom_call.1} parent=11 // pred_check_branch
          %403 = sbr.rel (%p401) target = $region20
        $region19: #{tpu_custom_call.1} parent=11 // pred_region
          _
        $region20: #{tpu_custom_call.1} parent=11 // pred_fallthru
          _
        // Predicated region
        $region21: #{tpu_custom_call.1} parent=11 // pred_check
          %p404 = pneg %p118
        $region22: #{tpu_custom_call.1} parent=11 // pred_check_branch
          %406 = sbr.rel (%p404) target = $region24
        $region23: #{tpu_custom_call.1} parent=11 // pred_region
          _
        $region24: #{tpu_custom_call.1} parent=11 // pred_fallthru
          _
        // Predicated region
        $region25: #{tpu_custom_call.1} parent=11 // pred_check
          %p407 = pneg %p139
        $region26: #{tpu_custom_call.1} parent=11 // pred_check_branch
          %409 = sbr.rel (%p407) target = $region28
        $region27: #{tpu_custom_call.1} parent=11 // pred_region
          %s411 = ssub.s32 16, 16
          %412 = vsyncadd [#allocation6], %s411
          %s414 = sshll.u32 [#allocation5], 4
          %s415 = int_to_ptr.vmem [resolvable:$true] %s414
          %417 = dma.hbm_to_vmem [thread:$0]  %s4, 16, %s415, [#allocation6]
        $region28: #{tpu_custom_call.1} parent=11 // pred_fallthru
          _
        // Predicated region
        $region29: #{tpu_custom_call.1} parent=11 // pred_check
          %p418 = pneg %p160
        $region30: #{tpu_custom_call.1} parent=11 // pred_check_branch
          %420 = sbr.rel (%p418) target = $region32
        $region31: #{tpu_custom_call.1} parent=11 // pred_region
          %s422 = ssub.s32 16, 16
          %423 = vsyncadd [#allocation6], %s422
          %s425 = sshll.u32 [#allocation7], 4
          %s426 = int_to_ptr.vmem [resolvable:$true] %s425
          %428 = dma.hbm_to_vmem [thread:$0]  %s5, 16, %s426, [#allocation6]
        $region32: #{tpu_custom_call.1} parent=11 // pred_fallthru
          _
        // Predicated region
        $region33: #{tpu_custom_call.1} parent=11 // pred_check
          %p429 = pneg %p181
        $region34: #{tpu_custom_call.1} parent=11 // pred_check_branch
          %431 = sbr.rel (%p429) target = $region36
        $region35: #{tpu_custom_call.1} parent=11 // pred_region
          %s433 = ssub.s32 16, 16
          %434 = vsyncadd [#allocation9], %s433
          %s436 = sshll.u32 [#allocation8], 4
          %s437 = int_to_ptr.vmem [resolvable:$true] %s436
          %439 = dma.hbm_to_vmem [thread:$0]  %s6, 16, %s437, [#allocation9]
        $region36: #{tpu_custom_call.1} parent=11 // pred_fallthru
          _
        // Predicated region
        $region37: #{tpu_custom_call.1} parent=11 // pred_check
          %p440 = pneg %p202
        $region38: #{tpu_custom_call.1} parent=11 // pred_check_branch
          %442 = sbr.rel (%p440) target = $region40
        $region39: #{tpu_custom_call.1} parent=11 // pred_region
          _
        $region40: #{tpu_custom_call.1} parent=11 // pred_fallthru
          _
        // Predicated region
        $region41: #{tpu_custom_call.1} parent=11 // pred_check
          %p443 = pneg %p223
        $region42: #{tpu_custom_call.1} parent=11 // pred_check_branch
          %445 = sbr.rel (%p443) target = $region44
        $region43: #{tpu_custom_call.1} parent=11 // pred_region
          %s447 = ssub.s32 16, 16
          %448 = vsyncadd [#allocation9], %s447
          %s450 = sshll.u32 [#allocation10], 4
          %s451 = int_to_ptr.vmem [resolvable:$true] %s450
          %453 = dma.hbm_to_vmem [thread:$0]  %s8, 16, %s451, [#allocation9]
        $region44: #{tpu_custom_call.1} parent=11 // pred_fallthru
          _
        // Predicated region
        $region45: #{tpu_custom_call.1} parent=11 // pred_check
          %p454 = pneg %p244
        $region46: #{tpu_custom_call.1} parent=11 // pred_check_branch
          %456 = sbr.rel (%p454) target = $region48
        $region47: #{tpu_custom_call.1} parent=11 // pred_region
          %s458 = ssub.s32 256, 256
          %459 = vsyncadd [#allocation12], %s458
          %s460 = sshll.u32 [#allocation11], 4
          %s461 = int_to_ptr.vmem [resolvable:$true] %s460
          %466 = dma.hbm_to_vmem [thread:$0]  %s9, 256, %s461, [#allocation12], 64, 64, 4
        $region48: #{tpu_custom_call.1} parent=11 // pred_fallthru
          _
        // Predicated region
        $region49: #{tpu_custom_call.1} parent=11 // pred_check
          %p467 = pneg %p265
        $region50: #{tpu_custom_call.1} parent=11 // pred_check_branch
          %469 = sbr.rel (%p467) target = $region52
        $region51: #{tpu_custom_call.1} parent=11 // pred_region
          %s471 = ssub.s32 16, 16
          %472 = vsyncadd [#allocation12], %s471
          %s474 = sshll.u32 [#allocation13], 4
          %s475 = int_to_ptr.vmem [resolvable:$true] %s474
          %477 = dma.hbm_to_vmem [thread:$0]  %s10, 16, %s475, [#allocation12]
        $region52: #{tpu_custom_call.1} parent=11 // pred_fallthru
          _
        // Predicated region
        $region53: #{tpu_custom_call.1} parent=11 // pred_check
          %p478 = pneg %p286
        $region54: #{tpu_custom_call.1} parent=11 // pred_check_branch
          %480 = sbr.rel (%p478) target = $region56
        $region55: #{tpu_custom_call.1} parent=11 // pred_region
          _
        $region56: #{tpu_custom_call.1} parent=11 // pred_fallthru
          _
        // Predicated region
        $region57: #{tpu_custom_call.1} parent=11 // pred_check
          %p481 = pneg %p307
        $region58: #{tpu_custom_call.1} parent=11 // pred_check_branch
          %483 = sbr.rel (%p481) target = $region60
        $region59: #{tpu_custom_call.1} parent=11 // pred_region
          _
        $region60: #{tpu_custom_call.1} parent=11 // pred_fallthru
          _
        // Predicated region
        $region61: #{tpu_custom_call.1} parent=11 // pred_check
          %p484 = pneg %p328
        $region62: #{tpu_custom_call.1} parent=11 // pred_check_branch
          %486 = sbr.rel (%p484) target = $region64
        $region63: #{tpu_custom_call.1} parent=11 // pred_region
          %s488 = ssub.s32 256, 256
          %489 = vsyncadd [#allocation15], %s488
          %s490 = sshll.u32 [#allocation14], 4
          %s491 = int_to_ptr.vmem [resolvable:$true] %s490
          %496 = dma.hbm_to_vmem [thread:$0]  %s13, 256, %s491, [#allocation15], 64, 64, 4
        $region64: #{tpu_custom_call.1} parent=11 // pred_fallthru
          _
        // Predicated region
        $region65: #{tpu_custom_call.1} parent=11 // pred_check
          %p497 = pneg %p349
        $region66: #{tpu_custom_call.1} parent=11 // pred_check_branch
          %499 = sbr.rel (%p497) target = $region68
        $region67: #{tpu_custom_call.1} parent=11 // pred_region
          _
        $region68: #{tpu_custom_call.1} parent=11 // pred_fallthru
          _
      $region12: #{tpu_custom_call.1} parent=5 // pred_fallthru
        _
      %p500 = scmp.lt.s32.totalorder %s29, 2
      // Predicated region
      $region69: #{tpu_custom_call.1} parent=5 // pred_check
        %p501 = pneg %p500
      $region70: #{tpu_custom_call.1} parent=5 // pred_check_branch
        %503 = sbr.rel (%p501) target = $region72
      $region71: #{tpu_custom_call.1} parent=5 // pred_region
        // Predicated region
        $region73: #{tpu_custom_call.1} parent=71 // pred_check
          %p504 = pneg %p49
        $region74: #{tpu_custom_call.1} parent=71 // pred_check_branch
          %506 = sbr.rel (%p504) target = $region76
        $region75: #{tpu_custom_call.1} parent=71 // pred_region
          %p507 = scmp.lt.s32.totalorder %s29, 1
          %s508 = scalar_select %p507, %s29, 1
          %s509 = smul.addr %s508, 4
          %s510 = scalar_lea.vmem %s0, %s509
        $region76: #{tpu_custom_call.1} parent=71 // pred_fallthru
          _
      $region72: #{tpu_custom_call.1} parent=5 // pred_fallthru
        _
      %p511 = scmp.le.s32.totalorder 1, %s29
      %p512 = scmp.lt.s32.totalorder %s29, 3
      %p513 = pnand %p511, %p512
      %p514 = pneg %p513
      // Predicated region
      $region77: #{tpu_custom_call.1} parent=5 // pred_check
        _
      $region78: #{tpu_custom_call.1} parent=5 // pred_check_branch
        %516 = sbr.rel (%p513) target = $region80
      $region79: #{tpu_custom_call.1} parent=5 // pred_region
        %s517 = ssub.s32 %s29, 1
        // Predicated region
        $region81: #{tpu_custom_call.1} parent=79 // pred_check
          %p518 = pneg %p76
        $region82: #{tpu_custom_call.1} parent=79 // pred_check_branch
          %520 = sbr.rel (%p518) target = $region84
        $region83: #{tpu_custom_call.1} parent=79 // pred_region
          %521 = dma.done [#allocation3], 64
        $region84: #{tpu_custom_call.1} parent=79 // pred_fallthru
          _
        // Predicated region
        $region85: #{tpu_custom_call.1} parent=79 // pred_check
          %p522 = pneg %p139
        $region86: #{tpu_custom_call.1} parent=79 // pred_check_branch
          %524 = sbr.rel (%p522) target = $region88
        $region87: #{tpu_custom_call.1} parent=79 // pred_region
          %525 = dma.done [#allocation6], 16
        $region88: #{tpu_custom_call.1} parent=79 // pred_fallthru
          _
        // Predicated region
        $region89: #{tpu_custom_call.1} parent=79 // pred_check
          %p526 = pneg %p160
        $region90: #{tpu_custom_call.1} parent=79 // pred_check_branch
          %528 = sbr.rel (%p526) target = $region92
        $region91: #{tpu_custom_call.1} parent=79 // pred_region
          %529 = dma.done [#allocation6], 16
        $region92: #{tpu_custom_call.1} parent=79 // pred_fallthru
          _
        // Predicated region
        $region93: #{tpu_custom_call.1} parent=79 // pred_check
          %p530 = pneg %p181
        $region94: #{tpu_custom_call.1} parent=79 // pred_check_branch
          %532 = sbr.rel (%p530) target = $region96
        $region95: #{tpu_custom_call.1} parent=79 // pred_region
          %533 = dma.done [#allocation9], 16
        $region96: #{tpu_custom_call.1} parent=79 // pred_fallthru
          _
        // Predicated region
        $region97: #{tpu_custom_call.1} parent=79 // pred_check
          %p534 = pneg %p223
        $region98: #{tpu_custom_call.1} parent=79 // pred_check_branch
          %536 = sbr.rel (%p534) target = $region100
        $region99: #{tpu_custom_call.1} parent=79 // pred_region
          %537 = dma.done [#allocation9], 16
        $region100: #{tpu_custom_call.1} parent=79 // pred_fallthru
          _
        // Predicated region
        $region101: #{tpu_custom_call.1} parent=79 // pred_check
          %p538 = pneg %p244
        $region102: #{tpu_custom_call.1} parent=79 // pred_check_branch
          %540 = sbr.rel (%p538) target = $region104
        $region103: #{tpu_custom_call.1} parent=79 // pred_region
          %541 = dma.done [#allocation12], 256
        $region104: #{tpu_custom_call.1} parent=79 // pred_fallthru
          _
        // Predicated region
        $region105: #{tpu_custom_call.1} parent=79 // pred_check
          %p542 = pneg %p265
        $region106: #{tpu_custom_call.1} parent=79 // pred_check_branch
          %544 = sbr.rel (%p542) target = $region108
        $region107: #{tpu_custom_call.1} parent=79 // pred_region
          %545 = dma.done [#allocation12], 16
        $region108: #{tpu_custom_call.1} parent=79 // pred_fallthru
          _
        // Predicated region
        $region109: #{tpu_custom_call.1} parent=79 // pred_check
          %p546 = pneg %p328
        $region110: #{tpu_custom_call.1} parent=79 // pred_check_branch
          %548 = sbr.rel (%p546) target = $region112
        $region111: #{tpu_custom_call.1} parent=79 // pred_region
          %549 = dma.done [#allocation15], 256
        $region112: #{tpu_custom_call.1} parent=79 // pred_fallthru
          _
        %p550 = scmp.lt.s32.totalorder %s34, 1
        %s551 = scalar_select %p550, %s34, 1
        %s552 = smul.addr %s551, 4
        %s553 = scalar_lea.vmem %s0, %s552
        %p554 = pneg %p55
        %p555 = pneg %p52
        %p556 = pneg %p76
        %p557 = pneg %p73
        %p558 = pneg %p97
        %p559 = pneg %p94
        %p560 = pneg %p118
        %p561 = pneg %p115
        %p562 = pneg %p139
        %p563 = pneg %p136
        %p564 = pneg %p160
        %p565 = pneg %p157
        %p566 = pneg %p181
        %p567 = pneg %p178
        %p568 = pneg %p202
        %p569 = pneg %p199
        %p570 = pneg %p223
        %p571 = pneg %p220
        %p572 = pneg %p244
        %p573 = pneg %p241
        %p574 = pneg %p265
        %p575 = pneg %p262
        %p576 = pneg %p286
        %p577 = pneg %p283
        %p578 = pneg %p307
        %p579 = pneg %p304
        %p580 = pneg %p328
        %p581 = pneg %p325
        %p582 = pneg %p349
        %p583 = pneg %p346
        %p584 = pneg %p375
        %p585 = pneg %p372
        %s586 = sand.u32 %s362, 1
        %s587 = scalar_lea.sflag [#allocation4], %s586
        %s588 = sand.u32 %s362, 1
        %s589 = smul.addr %s588, 8
        %s590 = scalar_lea.vmem [#allocation16], %s589
        %p591 = scmp.lt.s32.totalorder %s34, 1
        %s592 = scalar_select %p591, %s34, 1
        %s593 = smul.addr %s592, 4
        %s594 = scalar_lea.vmem %s0, %s593
        %v596 = vld [vmem:[%s594] sm:$0xf]
        %v597 = vld [vmem:[#allocation2] sm:$0xf]
        %v598 = vld [vmem:[%s2] sm:$0x1]
        %v600 = vlaneseq
        %v601 = vshrl.u32 %v600, 7
        %v602 = vsub.s32 0, %v601
        %v603 = vrot.slane %v598, %v602
        %vm605 = vcmask 64512
        %v607 = vsel %vm605, %v596, 0
        %vm609 = vcmask 1043456
        %v611 = vsel %vm609, %v597, 0
        %613 = vmatprep.subr.bf16.mxu0 0
        %614 = vmatpush1.bf16.msra.mxu0 %v611
        %615 = vmatprep.subr.bf16.mxu0 0
        %616 = vmatpush1.bf16.msra.mxu0 0
        %617 = vmatprep.subr.bf16.mxu0 0
        %618 = vmatpush1.bf16.msra.mxu0 0
        %619 = vmatprep.subr.bf16.mxu0 0
        %620 = vmatpush1.bf16.msra.mxu0 0
        %621 = vmatprep.subr.bf16.mxu0 0
        %622 = vmatpush1.bf16.msra.mxu0 0
        %623 = vmatprep.subr.bf16.mxu0 0
        %624 = vmatpush1.bf16.msra.mxu0 0
        %625 = vmatprep.subr.bf16.mxu0 0
        %626 = vmatpush1.bf16.msra.mxu0 0
        %627 = vmatprep.subr.bf16.mxu0 0
        %628 = vmatpush1.bf16.msra.mxu0 0
        %629 = vmatprep.subr.bf16.mxu0 0
        %630 = vmatpush1.bf16.msra.mxu0 0
        %631 = vmatprep.subr.bf16.mxu0 0
        %632 = vmatpush1.bf16.msra.mxu0 0
        %633 = vmatprep.subr.bf16.mxu0 0
        %634 = vmatpush1.bf16.msra.mxu0 0
        %635 = vmatprep.subr.bf16.mxu0 0
        %636 = vmatpush1.bf16.msra.mxu0 0
        %637 = vmatprep.subr.bf16.mxu0 0
        %638 = vmatpush1.bf16.msra.mxu0 0
        %639 = vmatprep.subr.bf16.mxu0 0
        %640 = vmatpush1.bf16.msra.mxu0 0
        %641 = vmatprep.subr.bf16.mxu0 0
        %642 = vmatpush1.bf16.msra.mxu0 0
        %643 = vmatprep.subr.bf16.mxu0 0
        %644 = vmatpush1.bf16.msra.mxu0 0
        %645 = vmatprep.mubr.bf16.mxu0 0
        %646 = vmatmul.mubr.bf16.gmra.mrb[0].mxu0 %v607
        %v647 = vpop.f32.mrb[0].mxu0
        %v648 = vadd.f32 %v603, %v647
        %v649 = vpop.f32.mrb[0].mxu0
        %v650 = vpop.f32.mrb[0].mxu0
        %v651 = vpop.f32.mrb[0].mxu0
        %652 = vdwg.mxu0
        %v653 = vmax.f32 %v648, 0.0
        %v654 = vpack.c.bf16 %v653, %v653
        %v655 = vld [vmem:[%s3] sm:$0xf]
        %v656 = vld [vmem:[%s3 + $0x4] sm:$0xf]
        %v657 = vld [vmem:[%s3 + $0x8] sm:$0xf]
        %v658 = vld [vmem:[%s3 + $0xc] sm:$0xf]
        %v659 = vld [vmem:[#allocation5] sm:$0x1]
        %v661 = vlaneseq
        %v662 = vshrl.u32 %v661, 7
        %v663 = vsub.s32 0, %v662
        %v664 = vrot.slane %v659, %v663
        %v670 = vunpack.c.l.b16 %v655
        %v671 = vunpack.c.l.b16 %v656
        %v672 = vunpack.c.l.b16 %v657
        %v673 = vunpack.c.l.b16 %v658
        %v674 = vpack.c.b16 %v671, %v670
        %v675 = vpack.c.b16 %v673, %v672
        %vm678 = vcmask 261120
        %v680 = vsel %vm678, %v654, 0
        %682 = vmatprep.subr.bf16.mxu0 0
        %683 = vmatpush1.bf16.msra.mxu0 %v674
        %684 = vmatprep.subr.bf16.mxu0 0
        %685 = vmatpush1.bf16.msra.mxu0 %v675
        %686 = vmatprep.subr.bf16.mxu0 0
        %687 = vmatpush1.bf16.msra.mxu0 0
        %688 = vmatprep.subr.bf16.mxu0 0
        %689 = vmatpush1.bf16.msra.mxu0 0
        %690 = vmatprep.subr.bf16.mxu0 0
        %691 = vmatpush1.bf16.msra.mxu0 0
        %692 = vmatprep.subr.bf16.mxu0 0
        %693 = vmatpush1.bf16.msra.mxu0 0
        %694 = vmatprep.subr.bf16.mxu0 0
        %695 = vmatpush1.bf16.msra.mxu0 0
        %696 = vmatprep.subr.bf16.mxu0 0
        %697 = vmatpush1.bf16.msra.mxu0 0
        %698 = vmatprep.subr.bf16.mxu0 0
        %699 = vmatpush1.bf16.msra.mxu0 0
        %700 = vmatprep.subr.bf16.mxu0 0
        %701 = vmatpush1.bf16.msra.mxu0 0
        %702 = vmatprep.subr.bf16.mxu0 0
        %703 = vmatpush1.bf16.msra.mxu0 0
        %704 = vmatprep.subr.bf16.mxu0 0
        %705 = vmatpush1.bf16.msra.mxu0 0
        %706 = vmatprep.subr.bf16.mxu0 0
        %707 = vmatpush1.bf16.msra.mxu0 0
        %708 = vmatprep.subr.bf16.mxu0 0
        %709 = vmatpush1.bf16.msra.mxu0 0
        %710 = vmatprep.subr.bf16.mxu0 0
        %711 = vmatpush1.bf16.msra.mxu0 0
        %712 = vmatprep.subr.bf16.mxu0 0
        %713 = vmatpush1.bf16.msra.mxu0 0
        %714 = vmatprep.mubr.bf16.mxu0 0
        %715 = vmatmul.mubr.bf16.gmra.mrb[0].mxu0 %v680
        %v716 = vpop.f32.mrb[0].mxu0
        %v717 = vadd.f32 %v664, %v716
        %v718 = vpop.f32.mrb[0].mxu0
        %v719 = vpop.f32.mrb[0].mxu0
        %v720 = vpop.f32.mrb[0].mxu0
        %721 = vdwg.mxu0
        %v722 = vsel %vm678, %v717, 0.0
        %723 = vadd.xlane.f32.xlu0 %v722
        %v724 = vpop.xlane.xlu0 %723
        %v725 = vrcp.pop 32.0
        %v726 = vmul.f32 %v724, %v725
        %v727 = vsub.f32 %v717, %v726
        %v728 = vmul.f32 %v727, %v727
        %v729 = vsel %vm678, %v728, 0.0
        %730 = vadd.xlane.f32.xlu0 %v729
        %v731 = vpop.xlane.xlu0 %730
        %v732 = vmul.f32 %v731, %v725
        %v733 = vadd.f32 %v732, 1e-05
        %v734 = vrsqrt.pop %v733
        %v735 = vmul.f32 %v727, %v734
        %v736 = vld [vmem:[#allocation7] sm:$0x1]
        %v738 = vlaneseq
        %v739 = vshrl.u32 %v738, 7
        %v740 = vsub.s32 0, %v739
        %v741 = vrot.slane %v736, %v740
        %v743 = vmul.f32 %v735, %v741
        %v744 = vld [vmem:[#allocation8] sm:$0x1]
        %v746 = vlaneseq
        %v747 = vshrl.u32 %v746, 7
        %v748 = vsub.s32 0, %v747
        %v749 = vrot.slane %v744, %v748
        %v751 = vadd.f32 %v743, %v749
        %v752 = vpack.c.bf16 %v751, %v751
        %v753 = vld [vmem:[%s7] sm:$0xf]
        %v754 = vld [vmem:[%s7 + $0x4] sm:$0xf]
        %v755 = vld [vmem:[%s7 + $0x8] sm:$0xf]
        %v756 = vld [vmem:[%s7 + $0xc] sm:$0xf]
        %v757 = vld [vmem:[#allocation10] sm:$0x1]
        %v759 = vlaneseq
        %v760 = vshrl.u32 %v759, 7
        %v761 = vsub.s32 0, %v760
        %v762 = vrot.slane %v757, %v761
        %v768 = vunpack.c.l.b16 %v753
        %v769 = vunpack.c.l.b16 %v754
        %v770 = vunpack.c.l.b16 %v755
        %v771 = vunpack.c.l.b16 %v756
        %v772 = vpack.c.b16 %v769, %v768
        %v773 = vpack.c.b16 %v771, %v770
        %v777 = vsel %vm678, %v752, 0
        %779 = vmatprep.subr.bf16.mxu0 0
        %780 = vmatpush1.bf16.msra.mxu0 %v772
        %781 = vmatprep.subr.bf16.mxu0 0
        %782 = vmatpush1.bf16.msra.mxu0 %v773
        %783 = vmatprep.subr.bf16.mxu0 0
        %784 = vmatpush1.bf16.msra.mxu0 0
        %785 = vmatprep.subr.bf16.mxu0 0
        %786 = vmatpush1.bf16.msra.mxu0 0
        %787 = vmatprep.subr.bf16.mxu0 0
        %788 = vmatpush1.bf16.msra.mxu0 0
        %789 = vmatprep.subr.bf16.mxu0 0
        %790 = vmatpush1.bf16.msra.mxu0 0
        %791 = vmatprep.subr.bf16.mxu0 0
        %792 = vmatpush1.bf16.msra.mxu0 0
        %793 = vmatprep.subr.bf16.mxu0 0
        %794 = vmatpush1.bf16.msra.mxu0 0
        %795 = vmatprep.subr.bf16.mxu0 0
        %796 = vmatpush1.bf16.msra.mxu0 0
        %797 = vmatprep.subr.bf16.mxu0 0
        %798 = vmatpush1.bf16.msra.mxu0 0
        %799 = vmatprep.subr.bf16.mxu0 0
        %800 = vmatpush1.bf16.msra.mxu0 0
        %801 = vmatprep.subr.bf16.mxu0 0
        %802 = vmatpush1.bf16.msra.mxu0 0
        %803 = vmatprep.subr.bf16.mxu0 0
        %804 = vmatpush1.bf16.msra.mxu0 0
        %805 = vmatprep.subr.bf16.mxu0 0
        %806 = vmatpush1.bf16.msra.mxu0 0
        %807 = vmatprep.subr.bf16.mxu0 0
        %808 = vmatpush1.bf16.msra.mxu0 0
        %809 = vmatprep.subr.bf16.mxu0 0
        %810 = vmatpush1.bf16.msra.mxu0 0
        %811 = vmatprep.mubr.bf16.mxu0 0
        %812 = vmatmul.mubr.bf16.gmra.mrb[0].mxu0 %v777
        %v813 = vpop.f32.mrb[0].mxu0
        %v814 = vadd.f32 %v762, %v813
        %v815 = vpop.f32.mrb[0].mxu0
        %v816 = vpop.f32.mrb[0].mxu0
        %v817 = vpop.f32.mrb[0].mxu0
        %818 = vdwg.mxu0
        %v819 = vpack.c.bf16 %v814, %v814
        %v820 = vld [vmem:[#allocation11] sm:$0xf]
        %v821 = vld [vmem:[#allocation11 + $0x4] sm:$0xf]
        %v822 = vld [vmem:[#allocation11 + $0x8] sm:$0xf]
        %v823 = vld [vmem:[#allocation11 + $0xc] sm:$0xf]
        %v824 = vld [vmem:[#allocation13] sm:$0x1]
        %v826 = vlaneseq
        %v827 = vshrl.u32 %v826, 7
        %v828 = vsub.s32 0, %v827
        %v829 = vrot.slane %v824, %v828
        %v835 = vunpack.c.l.b16 %v820
        %v836 = vunpack.c.l.b16 %v821
        %v837 = vunpack.c.l.b16 %v822
        %v838 = vunpack.c.l.b16 %v823
        %v839 = vpack.c.b16 %v836, %v835
        %v840 = vpack.c.b16 %v838, %v837
        %843 = vmatprep.subr.bf16.mxu0 0
        %844 = vmatpush1.bf16.msra.mxu0 %v839
        %845 = vmatprep.subr.bf16.mxu0 0
        %846 = vmatpush1.bf16.msra.mxu0 %v840
        %847 = vmatprep.subr.bf16.mxu0 0
        %848 = vmatpush1.bf16.msra.mxu0 0
        %849 = vmatprep.subr.bf16.mxu0 0
        %850 = vmatpush1.bf16.msra.mxu0 0
        %851 = vmatprep.subr.bf16.mxu0 0
        %852 = vmatpush1.bf16.msra.mxu0 0
        %853 = vmatprep.subr.bf16.mxu0 0
        %854 = vmatpush1.bf16.msra.mxu0 0
        %855 = vmatprep.subr.bf16.mxu0 0
        %856 = vmatpush1.bf16.msra.mxu0 0
        %857 = vmatprep.subr.bf16.mxu0 0
        %858 = vmatpush1.bf16.msra.mxu0 0
        %859 = vmatprep.subr.bf16.mxu0 0
        %860 = vmatpush1.bf16.msra.mxu0 0
        %861 = vmatprep.subr.bf16.mxu0 0
        %862 = vmatpush1.bf16.msra.mxu0 0
        %863 = vmatprep.subr.bf16.mxu0 0
        %864 = vmatpush1.bf16.msra.mxu0 0
        %865 = vmatprep.subr.bf16.mxu0 0
        %866 = vmatpush1.bf16.msra.mxu0 0
        %867 = vmatprep.subr.bf16.mxu0 0
        %868 = vmatpush1.bf16.msra.mxu0 0
        %869 = vmatprep.subr.bf16.mxu0 0
        %870 = vmatpush1.bf16.msra.mxu0 0
        %871 = vmatprep.subr.bf16.mxu0 0
        %872 = vmatpush1.bf16.msra.mxu0 0
        %873 = vmatprep.subr.bf16.mxu0 0
        %874 = vmatpush1.bf16.msra.mxu0 0
        %875 = vmatprep.mubr.bf16.mxu0 0
        %876 = vmatmul.mubr.bf16.gmra.mrb[0].mxu0 %v777
        %v877 = vpop.f32.mrb[0].mxu0
        %v878 = vadd.f32 %v829, %v877
        %v879 = vpop.f32.mrb[0].mxu0
        %v880 = vpop.f32.mrb[0].mxu0
        %v881 = vpop.f32.mrb[0].mxu0
        %882 = vdwg.mxu0
        %v883 = vpack.c.bf16 %v878, %v878
        %v884 = vld [vmem:[%s11] sm:$0xf]
        %v885 = vld [vmem:[%s11 + $0x4] sm:$0xf]
        %v886 = vld [vmem:[%s11 + $0x8] sm:$0xf]
        %v887 = vld [vmem:[%s11 + $0xc] sm:$0xf]
        %v888 = vld [vmem:[%s12] sm:$0x1]
        %v890 = vlaneseq
        %v891 = vshrl.u32 %v890, 7
        %v892 = vsub.s32 0, %v891
        %v893 = vrot.slane %v888, %v892
        %v899 = vunpack.c.l.b16 %v884
        %v900 = vunpack.c.l.b16 %v885
        %v901 = vunpack.c.l.b16 %v886
        %v902 = vunpack.c.l.b16 %v887
        %v903 = vpack.c.b16 %v900, %v899
        %v904 = vpack.c.b16 %v902, %v901
        %907 = vmatprep.subr.bf16.mxu0 0
        %908 = vmatpush1.bf16.msra.mxu0 %v903
        %909 = vmatprep.subr.bf16.mxu0 0
        %910 = vmatpush1.bf16.msra.mxu0 %v904
        %911 = vmatprep.subr.bf16.mxu0 0
        %912 = vmatpush1.bf16.msra.mxu0 0
        %913 = vmatprep.subr.bf16.mxu0 0
        %914 = vmatpush1.bf16.msra.mxu0 0
        %915 = vmatprep.subr.bf16.mxu0 0
        %916 = vmatpush1.bf16.msra.mxu0 0
        %917 = vmatprep.subr.bf16.mxu0 0
        %918 = vmatpush1.bf16.msra.mxu0 0
        %919 = vmatprep.subr.bf16.mxu0 0
        %920 = vmatpush1.bf16.msra.mxu0 0
        %921 = vmatprep.subr.bf16.mxu0 0
        %922 = vmatpush1.bf16.msra.mxu0 0
        %923 = vmatprep.subr.bf16.mxu0 0
        %924 = vmatpush1.bf16.msra.mxu0 0
        %925 = vmatprep.subr.bf16.mxu0 0
        %926 = vmatpush1.bf16.msra.mxu0 0
        %927 = vmatprep.subr.bf16.mxu0 0
        %928 = vmatpush1.bf16.msra.mxu0 0
        %929 = vmatprep.subr.bf16.mxu0 0
        %930 = vmatpush1.bf16.msra.mxu0 0
        %931 = vmatprep.subr.bf16.mxu0 0
        %932 = vmatpush1.bf16.msra.mxu0 0
        %933 = vmatprep.subr.bf16.mxu0 0
        %934 = vmatpush1.bf16.msra.mxu0 0
        %935 = vmatprep.subr.bf16.mxu0 0
        %936 = vmatpush1.bf16.msra.mxu0 0
        %937 = vmatprep.subr.bf16.mxu0 0
        %938 = vmatpush1.bf16.msra.mxu0 0
        %939 = vmatprep.mubr.bf16.mxu0 0
        %940 = vmatmul.mubr.bf16.gmra.mrb[0].mxu0 %v777
        %v941 = vpop.f32.mrb[0].mxu0
        %v942 = vadd.f32 %v893, %v941
        %v943 = vpop.f32.mrb[0].mxu0
        %v944 = vpop.f32.mrb[0].mxu0
        %v945 = vpop.f32.mrb[0].mxu0
        %946 = vdwg.mxu0
        %v947 = vpack.c.bf16 %v942, %v942
        %949 = vrot.lane.b32.xlu0 %v819, 124
        %v950 = vpop.permute.xlu0 %949
        %951 = vrot.lane.b32.xlu0 %v819, 120
        %v952 = vpop.permute.xlu0 %951
        %953 = vrot.lane.b32.xlu0 %v819, 116
        %v954 = vpop.permute.xlu0 %953
        %955 = vrot.lane.b32.xlu0 %v819, 112
        %v956 = vpop.permute.xlu0 %955
        %957 = vrot.lane.b32.xlu0 %v819, 108
        %v958 = vpop.permute.xlu0 %957
        %959 = vrot.lane.b32.xlu0 %v819, 104
        %v960 = vpop.permute.xlu0 %959
        %961 = vrot.lane.b32.xlu0 %v819, 100
        %v962 = vpop.permute.xlu0 %961
        %964 = vrot.lane.b32.xlu0 %v883, 124
        %v965 = vpop.permute.xlu0 %964
        %966 = vrot.lane.b32.xlu0 %v883, 120
        %v967 = vpop.permute.xlu0 %966
        %968 = vrot.lane.b32.xlu0 %v883, 116
        %v969 = vpop.permute.xlu0 %968
        %970 = vrot.lane.b32.xlu0 %v883, 112
        %v971 = vpop.permute.xlu0 %970
        %972 = vrot.lane.b32.xlu0 %v883, 108
        %v973 = vpop.permute.xlu0 %972
        %974 = vrot.lane.b32.xlu0 %v883, 104
        %v975 = vpop.permute.xlu0 %974
        %976 = vrot.lane.b32.xlu0 %v883, 100
        %v977 = vpop.permute.xlu0 %976
        %979 = vrot.lane.b32.xlu0 %v947, 124
        %v980 = vpop.permute.xlu0 %979
        %981 = vrot.lane.b32.xlu0 %v947, 120
        %v982 = vpop.permute.xlu0 %981
        %983 = vrot.lane.b32.xlu0 %v947, 116
        %v984 = vpop.permute.xlu0 %983
        %985 = vrot.lane.b32.xlu0 %v947, 112
        %v986 = vpop.permute.xlu0 %985
        %987 = vrot.lane.b32.xlu0 %v947, 108
        %v988 = vpop.permute.xlu0 %987
        %989 = vrot.lane.b32.xlu0 %v947, 104
        %v990 = vpop.permute.xlu0 %989
        %991 = vrot.lane.b32.xlu0 %v947, 100
        %v992 = vpop.permute.xlu0 %991
        %vm993 = vcmask 31744
        %v995 = vsel %vm993, %v819, 0
        %v998 = vsel %vm993, %v883, 0
        %1000 = vmatprep.subr.bf16.mxu0 0
        %1001 = vmatpush1.bf16.xpose.msra.mxu0 %v998
        %1002 = vmatprep.subr.bf16.mxu0 0
        %1003 = vmatpush1.bf16.xpose.msra.mxu0 0
        %1004 = vmatprep.subr.bf16.mxu0 0
        %1005 = vmatpush1.bf16.xpose.msra.mxu0 0
        %1006 = vmatprep.subr.bf16.mxu0 0
        %1007 = vmatpush1.bf16.xpose.msra.mxu0 0
        %1008 = vmatprep.subr.bf16.mxu0 0
        %1009 = vmatpush1.bf16.xpose.msra.mxu0 0
        %1010 = vmatprep.subr.bf16.mxu0 0
        %1011 = vmatpush1.bf16.xpose.msra.mxu0 0
        %1012 = vmatprep.subr.bf16.mxu0 0
        %1013 = vmatpush1.bf16.xpose.msra.mxu0 0
        %1014 = vmatprep.subr.bf16.mxu0 0
        %1015 = vmatpush1.bf16.xpose.msra.mxu0 0
        %1016 = vmatprep.subr.bf16.mxu0 0
        %1017 = vmatpush1.bf16.xpose.msra.mxu0 0
        %1018 = vmatprep.subr.bf16.mxu0 0
        %1019 = vmatpush1.bf16.xpose.msra.mxu0 0
        %1020 = vmatprep.subr.bf16.mxu0 0
        %1021 = vmatpush1.bf16.xpose.msra.mxu0 0
        %1022 = vmatprep.subr.bf16.mxu0 0
        %1023 = vmatpush1.bf16.xpose.msra.mxu0 0
        %1024 = vmatprep.subr.bf16.mxu0 0
        %1025 = vmatpush1.bf16.xpose.msra.mxu0 0
        %1026 = vmatprep.subr.bf16.mxu0 0
        %1027 = vmatpush1.bf16.xpose.msra.mxu0 0
        %1028 = vmatprep.subr.bf16.mxu0 0
        %1029 = vmatpush1.bf16.xpose.msra.mxu0 0
        %1030 = vmatprep.subr.bf16.mxu0 0
        %1031 = vmatpush1.bf16.xpose.msra.mxu0 0
        %1032 = vmatprep.mubr.bf16.mxu0 0
        %1033 = vmatmul.mubr.bf16.gmra.mrb[0].mxu0 %v995
        %v1034 = vpop.f32.mrb[0].mxu0
        %v1035 = vadd.f32 0.0, %v1034
        %v1036 = vpop.f32.mrb[0].mxu0
        %v1037 = vpop.f32.mrb[0].mxu0
        %v1038 = vpop.f32.mrb[0].mxu0
        %1039 = vdwg.mxu0
        %v1041 = vsel %vm993, %v950, 0
        %v1044 = vsel %vm993, %v965, 0
        %1046 = vmatprep.subr.bf16.mxu0 0
        %1047 = vmatpush1.bf16.xpose.msra.mxu0 %v1044
        %1048 = vmatprep.subr.bf16.mxu0 0
        %1049 = vmatpush1.bf16.xpose.msra.mxu0 0
        %1050 = vmatprep.subr.bf16.mxu0 0
        %1051 = vmatpush1.bf16.xpose.msra.mxu0 0
        %1052 = vmatprep.subr.bf16.mxu0 0
        %1053 = vmatpush1.bf16.xpose.msra.mxu0 0
        %1054 = vmatprep.subr.bf16.mxu0 0
        %1055 = vmatpush1.bf16.xpose.msra.mxu0 0
        %1056 = vmatprep.subr.bf16.mxu0 0
        %1057 = vmatpush1.bf16.xpose.msra.mxu0 0
        %1058 = vmatprep.subr.bf16.mxu0 0
        %1059 = vmatpush1.bf16.xpose.msra.mxu0 0
        %1060 = vmatprep.subr.bf16.mxu0 0
        %1061 = vmatpush1.bf16.xpose.msra.mxu0 0
        %1062 = vmatprep.subr.bf16.mxu0 0
        %1063 = vmatpush1.bf16.xpose.msra.mxu0 0
        %1064 = vmatprep.subr.bf16.mxu0 0
        %1065 = vmatpush1.bf16.xpose.msra.mxu0 0
        %1066 = vmatprep.subr.bf16.mxu0 0
        %1067 = vmatpush1.bf16.xpose.msra.mxu0 0
        %1068 = vmatprep.subr.bf16.mxu0 0
        %1069 = vmatpush1.bf16.xpose.msra.mxu0 0
        %1070 = vmatprep.subr.bf16.mxu0 0
        %1071 = vmatpush1.bf16.xpose.msra.mxu0 0
        %1072 = vmatprep.subr.bf16.mxu0 0
        %1073 = vmatpush1.bf16.xpose.msra.mxu0 0
        %1074 = vmatprep.subr.bf16.mxu0 0
        %1075 = vmatpush1.bf16.xpose.msra.mxu0 0
        %1076 = vmatprep.subr.bf16.mxu0 0
        %1077 = vmatpush1.bf16.xpose.msra.mxu0 0
        %1078 = vmatprep.mubr.bf16.mxu0 0
        %1079 = vmatmul.mubr.bf16.gmra.mrb[0].mxu0 %v1041
        %v1080 = vpop.f32.mrb[0].mxu0
        %v1081 = vadd.f32 0.0, %v1080
        %v1082 = vpop.f32.mrb[0].mxu0
        %v1083 = vpop.f32.mrb[0].mxu0
        %v1084 = vpop.f32.mrb[0].mxu0
        %1085 = vdwg.mxu0
        %v1087 = vsel %vm993, %v952, 0
        %v1090 = vsel %vm993, %v967, 0
        %1092 = vmatprep.subr.bf16.mxu0 0
        %1093 = vmatpush1.bf16.xpose.msra.mxu0 %v1090
        %1094 = vmatprep.subr.bf16.mxu0 0
        %1095 = vmatpush1.bf16.xpose.msra.mxu0 0
        %1096 = vmatprep.subr.bf16.mxu0 0
        %1097 = vmatpush1.bf16.xpose.msra.mxu0 0
        %1098 = vmatprep.subr.bf16.mxu0 0
        %1099 = vmatpush1.bf16.xpose.msra.mxu0 0
        %1100 = vmatprep.subr.bf16.mxu0 0
        %1101 = vmatpush1.bf16.xpose.msra.mxu0 0
        %1102 = vmatprep.subr.bf16.mxu0 0
        %1103 = vmatpush1.bf16.xpose.msra.mxu0 0
        %1104 = vmatprep.subr.bf16.mxu0 0
        %1105 = vmatpush1.bf16.xpose.msra.mxu0 0
        %1106 = vmatprep.subr.bf16.mxu0 0
        %1107 = vmatpush1.bf16.xpose.msra.mxu0 0
        %1108 = vmatprep.subr.bf16.mxu0 0
        %1109 = vmatpush1.bf16.xpose.msra.mxu0 0
        %1110 = vmatprep.subr.bf16.mxu0 0
        %1111 = vmatpush1.bf16.xpose.msra.mxu0 0
        %1112 = vmatprep.subr.bf16.mxu0 0
        %1113 = vmatpush1.bf16.xpose.msra.mxu0 0
        %1114 = vmatprep.subr.bf16.mxu0 0
        %1115 = vmatpush1.bf16.xpose.msra.mxu0 0
        %1116 = vmatprep.subr.bf16.mxu0 0
        %1117 = vmatpush1.bf16.xpose.msra.mxu0 0
        %1118 = vmatprep.subr.bf16.mxu0 0
        %1119 = vmatpush1.bf16.xpose.msra.mxu0 0
        %1120 = vmatprep.subr.bf16.mxu0 0
        %1121 = vmatpush1.bf16.xpose.msra.mxu0 0
        %1122 = vmatprep.subr.bf16.mxu0 0
        %1123 = vmatpush1.bf16.xpose.msra.mxu0 0
        %1124 = vmatprep.mubr.bf16.mxu0 0
        %1125 = vmatmul.mubr.bf16.gmra.mrb[0].mxu0 %v1087
        %v1126 = vpop.f32.mrb[0].mxu0
        %v1127 = vadd.f32 0.0, %v1126
        %v1128 = vpop.f32.mrb[0].mxu0
        %v1129 = vpop.f32.mrb[0].mxu0
        %v1130 = vpop.f32.mrb[0].mxu0
        %1131 = vdwg.mxu0
        %v1133 = vsel %vm993, %v954, 0
        %v1136 = vsel %vm993, %v969, 0
        %1138 = vmatprep.subr.bf16.mxu0 0
        %1139 = vmatpush1.bf16.xpose.msra.mxu0 %v1136
        %1140 = vmatprep.subr.bf16.mxu0 0
        %1141 = vmatpush1.bf16.xpose.msra.mxu0 0
        %1142 = vmatprep.subr.bf16.mxu0 0
        %1143 = vmatpush1.bf16.xpose.msra.mxu0 0
        %1144 = vmatprep.subr.bf16.mxu0 0
        %1145 = vmatpush1.bf16.xpose.msra.mxu0 0
        %1146 = vmatprep.subr.bf16.mxu0 0
        %1147 = vmatpush1.bf16.xpose.msra.mxu0 0
        %1148 = vmatprep.subr.bf16.mxu0 0
        %1149 = vmatpush1.bf16.xpose.msra.mxu0 0
        %1150 = vmatprep.subr.bf16.mxu0 0
        %1151 = vmatpush1.bf16.xpose.msra.mxu0 0
        %1152 = vmatprep.subr.bf16.mxu0 0
        %1153 = vmatpush1.bf16.xpose.msra.mxu0 0
        %1154 = vmatprep.subr.bf16.mxu0 0
        %1155 = vmatpush1.bf16.xpose.msra.mxu0 0
        %1156 = vmatprep.subr.bf16.mxu0 0
        %1157 = vmatpush1.bf16.xpose.msra.mxu0 0
        %1158 = vmatprep.subr.bf16.mxu0 0
        %1159 = vmatpush1.bf16.xpose.msra.mxu0 0
        %1160 = vmatprep.subr.bf16.mxu0 0
        %1161 = vmatpush1.bf16.xpose.msra.mxu0 0
        %1162 = vmatprep.subr.bf16.mxu0 0
        %1163 = vmatpush1.bf16.xpose.msra.mxu0 0
        %1164 = vmatprep.subr.bf16.mxu0 0
        %1165 = vmatpush1.bf16.xpose.msra.mxu0 0
        %1166 = vmatprep.subr.bf16.mxu0 0
        %1167 = vmatpush1.bf16.xpose.msra.mxu0 0
        %1168 = vmatprep.subr.bf16.mxu0 0
        %1169 = vmatpush1.bf16.xpose.msra.mxu0 0
        %1170 = vmatprep.mubr.bf16.mxu0 0
        %1171 = vmatmul.mubr.bf16.gmra.mrb[0].mxu0 %v1133
        %v1172 = vpop.f32.mrb[0].mxu0
        %v1173 = vadd.f32 0.0, %v1172
        %v1174 = vpop.f32.mrb[0].mxu0
        %v1175 = vpop.f32.mrb[0].mxu0
        %v1176 = vpop.f32.mrb[0].mxu0
        %1177 = vdwg.mxu0
        %v1179 = vsel %vm993, %v956, 0
        %v1182 = vsel %vm993, %v971, 0
        %1184 = vmatprep.subr.bf16.mxu0 0
        %1185 = vmatpush1.bf16.xpose.msra.mxu0 %v1182
        %1186 = vmatprep.subr.bf16.mxu0 0
        %1187 = vmatpush1.bf16.xpose.msra.mxu0 0
        %1188 = vmatprep.subr.bf16.mxu0 0
        %1189 = vmatpush1.bf16.xpose.msra.mxu0 0
        %1190 = vmatprep.subr.bf16.mxu0 0
        %1191 = vmatpush1.bf16.xpose.msra.mxu0 0
        %1192 = vmatprep.subr.bf16.mxu0 0
        %1193 = vmatpush1.bf16.xpose.msra.mxu0 0
        %1194 = vmatprep.subr.bf16.mxu0 0
        %1195 = vmatpush1.bf16.xpose.msra.mxu0 0
        %1196 = vmatprep.subr.bf16.mxu0 0
        %1197 = vmatpush1.bf16.xpose.msra.mxu0 0
        %1198 = vmatprep.subr.bf16.mxu0 0
        %1199 = vmatpush1.bf16.xpose.msra.mxu0 0
        %1200 = vmatprep.subr.bf16.mxu0 0
        %1201 = vmatpush1.bf16.xpose.msra.mxu0 0
        %1202 = vmatprep.subr.bf16.mxu0 0
        %1203 = vmatpush1.bf16.xpose.msra.mxu0 0
        %1204 = vmatprep.subr.bf16.mxu0 0
        %1205 = vmatpush1.bf16.xpose.msra.mxu0 0
        %1206 = vmatprep.subr.bf16.mxu0 0
        %1207 = vmatpush1.bf16.xpose.msra.mxu0 0
        %1208 = vmatprep.subr.bf16.mxu0 0
        %1209 = vmatpush1.bf16.xpose.msra.mxu0 0
        %1210 = vmatprep.subr.bf16.mxu0 0
        %1211 = vmatpush1.bf16.xpose.msra.mxu0 0
        %1212 = vmatprep.subr.bf16.mxu0 0
        %1213 = vmatpush1.bf16.xpose.msra.mxu0 0
        %1214 = vmatprep.subr.bf16.mxu0 0
        %1215 = vmatpush1.bf16.xpose.msra.mxu0 0
        %1216 = vmatprep.mubr.bf16.mxu0 0
        %1217 = vmatmul.mubr.bf16.gmra.mrb[0].mxu0 %v1179
        %v1218 = vpop.f32.mrb[0].mxu0
        %v1219 = vadd.f32 0.0, %v1218
        %v1220 = vpop.f32.mrb[0].mxu0
        %v1221 = vpop.f32.mrb[0].mxu0
        %v1222 = vpop.f32.mrb[0].mxu0
        %1223 = vdwg.mxu0
        %v1225 = vsel %vm993, %v958, 0
        %v1228 = vsel %vm993, %v973, 0
        %1230 = vmatprep.subr.bf16.mxu0 0
        %1231 = vmatpush1.bf16.xpose.msra.mxu0 %v1228
        %1232 = vmatprep.subr.bf16.mxu0 0
        %1233 = vmatpush1.bf16.xpose.msra.mxu0 0
        %1234 = vmatprep.subr.bf16.mxu0 0
        %1235 = vmatpush1.bf16.xpose.msra.mxu0 0
        %1236 = vmatprep.subr.bf16.mxu0 0
        %1237 = vmatpush1.bf16.xpose.msra.mxu0 0
        %1238 = vmatprep.subr.bf16.mxu0 0
        %1239 = vmatpush1.bf16.xpose.msra.mxu0 0
        %1240 = vmatprep.subr.bf16.mxu0 0
        %1241 = vmatpush1.bf16.xpose.msra.mxu0 0
        %1242 = vmatprep.subr.bf16.mxu0 0
        %1243 = vmatpush1.bf16.xpose.msra.mxu0 0
        %1244 = vmatprep.subr.bf16.mxu0 0
        %1245 = vmatpush1.bf16.xpose.msra.mxu0 0
        %1246 = vmatprep.subr.bf16.mxu0 0
        %1247 = vmatpush1.bf16.xpose.msra.mxu0 0
        %1248 = vmatprep.subr.bf16.mxu0 0
        %1249 = vmatpush1.bf16.xpose.msra.mxu0 0
        %1250 = vmatprep.subr.bf16.mxu0 0
        %1251 = vmatpush1.bf16.xpose.msra.mxu0 0
        %1252 = vmatprep.subr.bf16.mxu0 0
        %1253 = vmatpush1.bf16.xpose.msra.mxu0 0
        %1254 = vmatprep.subr.bf16.mxu0 0
        %1255 = vmatpush1.bf16.xpose.msra.mxu0 0
        %1256 = vmatprep.subr.bf16.mxu0 0
        %1257 = vmatpush1.bf16.xpose.msra.mxu0 0
        %1258 = vmatprep.subr.bf16.mxu0 0
        %1259 = vmatpush1.bf16.xpose.msra.mxu0 0
        %1260 = vmatprep.subr.bf16.mxu0 0
        %1261 = vmatpush1.bf16.xpose.msra.mxu0 0
        %1262 = vmatprep.mubr.bf16.mxu0 0
        %1263 = vmatmul.mubr.bf16.gmra.mrb[0].mxu0 %v1225
        %v1264 = vpop.f32.mrb[0].mxu0
        %v1265 = vadd.f32 0.0, %v1264
        %v1266 = vpop.f32.mrb[0].mxu0
        %v1267 = vpop.f32.mrb[0].mxu0
        %v1268 = vpop.f32.mrb[0].mxu0
        %1269 = vdwg.mxu0
        %v1271 = vsel %vm993, %v960, 0
        %v1274 = vsel %vm993, %v975, 0
        %1276 = vmatprep.subr.bf16.mxu0 0
        %1277 = vmatpush1.bf16.xpose.msra.mxu0 %v1274
        %1278 = vmatprep.subr.bf16.mxu0 0
        %1279 = vmatpush1.bf16.xpose.msra.mxu0 0
        %1280 = vmatprep.subr.bf16.mxu0 0
        %1281 = vmatpush1.bf16.xpose.msra.mxu0 0
        %1282 = vmatprep.subr.bf16.mxu0 0
        %1283 = vmatpush1.bf16.xpose.msra.mxu0 0
        %1284 = vmatprep.subr.bf16.mxu0 0
        %1285 = vmatpush1.bf16.xpose.msra.mxu0 0
        %1286 = vmatprep.subr.bf16.mxu0 0
        %1287 = vmatpush1.bf16.xpose.msra.mxu0 0
        %1288 = vmatprep.subr.bf16.mxu0 0
        %1289 = vmatpush1.bf16.xpose.msra.mxu0 0
        %1290 = vmatprep.subr.bf16.mxu0 0
        %1291 = vmatpush1.bf16.xpose.msra.mxu0 0
        %1292 = vmatprep.subr.bf16.mxu0 0
        %1293 = vmatpush1.bf16.xpose.msra.mxu0 0
        %1294 = vmatprep.subr.bf16.mxu0 0
        %1295 = vmatpush1.bf16.xpose.msra.mxu0 0
        %1296 = vmatprep.subr.bf16.mxu0 0
        %1297 = vmatpush1.bf16.xpose.msra.mxu0 0
        %1298 = vmatprep.subr.bf16.mxu0 0
        %1299 = vmatpush1.bf16.xpose.msra.mxu0 0
        %1300 = vmatprep.subr.bf16.mxu0 0
        %1301 = vmatpush1.bf16.xpose.msra.mxu0 0
        %1302 = vmatprep.subr.bf16.mxu0 0
        %1303 = vmatpush1.bf16.xpose.msra.mxu0 0
        %1304 = vmatprep.subr.bf16.mxu0 0
        %1305 = vmatpush1.bf16.xpose.msra.mxu0 0
        %1306 = vmatprep.subr.bf16.mxu0 0
        %1307 = vmatpush1.bf16.xpose.msra.mxu0 0
        %1308 = vmatprep.mubr.bf16.mxu0 0
        %1309 = vmatmul.mubr.bf16.gmra.mrb[0].mxu0 %v1271
        %v1310 = vpop.f32.mrb[0].mxu0
        %v1311 = vadd.f32 0.0, %v1310
        %v1312 = vpop.f32.mrb[0].mxu0
        %v1313 = vpop.f32.mrb[0].mxu0
        %v1314 = vpop.f32.mrb[0].mxu0
        %1315 = vdwg.mxu0
        %v1317 = vsel %vm993, %v962, 0
        %v1320 = vsel %vm993, %v977, 0
        %1322 = vmatprep.subr.bf16.mxu0 0
        %1323 = vmatpush1.bf16.xpose.msra.mxu0 %v1320
        %1324 = vmatprep.subr.bf16.mxu0 0
        %1325 = vmatpush1.bf16.xpose.msra.mxu0 0
        %1326 = vmatprep.subr.bf16.mxu0 0
        %1327 = vmatpush1.bf16.xpose.msra.mxu0 0
        %1328 = vmatprep.subr.bf16.mxu0 0
        %1329 = vmatpush1.bf16.xpose.msra.mxu0 0
        %1330 = vmatprep.subr.bf16.mxu0 0
        %1331 = vmatpush1.bf16.xpose.msra.mxu0 0
        %1332 = vmatprep.subr.bf16.mxu0 0
        %1333 = vmatpush1.bf16.xpose.msra.mxu0 0
        %1334 = vmatprep.subr.bf16.mxu0 0
        %1335 = vmatpush1.bf16.xpose.msra.mxu0 0
        %1336 = vmatprep.subr.bf16.mxu0 0
        %1337 = vmatpush1.bf16.xpose.msra.mxu0 0
        %1338 = vmatprep.subr.bf16.mxu0 0
        %1339 = vmatpush1.bf16.xpose.msra.mxu0 0
        %1340 = vmatprep.subr.bf16.mxu0 0
        %1341 = vmatpush1.bf16.xpose.msra.mxu0 0
        %1342 = vmatprep.subr.bf16.mxu0 0
        %1343 = vmatpush1.bf16.xpose.msra.mxu0 0
        %1344 = vmatprep.subr.bf16.mxu0 0
        %1345 = vmatpush1.bf16.xpose.msra.mxu0 0
        %1346 = vmatprep.subr.bf16.mxu0 0
        %1347 = vmatpush1.bf16.xpose.msra.mxu0 0
        %1348 = vmatprep.subr.bf16.mxu0 0
        %1349 = vmatpush1.bf16.xpose.msra.mxu0 0
        %1350 = vmatprep.subr.bf16.mxu0 0
        %1351 = vmatpush1.bf16.xpose.msra.mxu0 0
        %1352 = vmatprep.subr.bf16.mxu0 0
        %1353 = vmatpush1.bf16.xpose.msra.mxu0 0
        %1354 = vmatprep.mubr.bf16.mxu0 0
        %1355 = vmatmul.mubr.bf16.gmra.mrb[0].mxu0 %v1317
        %v1356 = vpop.f32.mrb[0].mxu0
        %v1357 = vadd.f32 0.0, %v1356
        %v1358 = vpop.f32.mrb[0].mxu0
        %v1359 = vpop.f32.mrb[0].mxu0
        %v1360 = vpop.f32.mrb[0].mxu0
        %1361 = vdwg.mxu0
        %v1362 = vmul.f32 %v1035, 0.5
        %v1363 = vmul.f32 %v1081, 0.5
        %v1364 = vmul.f32 %v1127, 0.5
        %v1365 = vmul.f32 %v1173, 0.5
        %v1366 = vmul.f32 %v1219, 0.5
        %v1367 = vmul.f32 %v1265, 0.5
        %v1368 = vmul.f32 %v1311, 0.5
        %v1369 = vmul.f32 %v1357, 0.5
        %v1370 = vlaneseq
        %v1371 = vshrl.u32 %v1370, 7
        %v1372 = vlaneseq
        %v1373 = vand.u32 %v1372, 127
        %vm1374 = vcmp.eq.s32.totalorder %v1371, %v1373
        %v1375 = vsel %vm1374, 1, 0
        %vm1376 = vcmp.eq.s32.totalorder %v1375, 1
        %v1377 = vsel %vm1376, 0.0, %v1362
        %v1378 = vsel %vm1376, 0.0, %v1363
        %v1379 = vsel %vm1376, 0.0, %v1364
        %v1380 = vsel %vm1376, 0.0, %v1365
        %v1381 = vsel %vm1376, 0.0, %v1366
        %v1382 = vsel %vm1376, 0.0, %v1367
        %v1383 = vsel %vm1376, 0.0, %v1368
        %v1384 = vsel %vm1376, 0.0, %v1369
        %v1385 = vsel %vm605, %v1377, -inf
        %1386 = vmax.xlane.f32.xlu0 %v1385
        %v1387 = vpop.xlane.xlu0 %1386
        %v1388 = vsel %vm605, %v1378, -inf
        %1389 = vmax.xlane.f32.xlu0 %v1388
        %v1390 = vpop.xlane.xlu0 %1389
        %v1391 = vsel %vm605, %v1379, -inf
        %1392 = vmax.xlane.f32.xlu0 %v1391
        %v1393 = vpop.xlane.xlu0 %1392
        %v1394 = vsel %vm605, %v1380, -inf
        %1395 = vmax.xlane.f32.xlu0 %v1394
        %v1396 = vpop.xlane.xlu0 %1395
        %v1397 = vsel %vm605, %v1381, -inf
        %1398 = vmax.xlane.f32.xlu0 %v1397
        %v1399 = vpop.xlane.xlu0 %1398
        %v1400 = vsel %vm605, %v1382, -inf
        %1401 = vmax.xlane.f32.xlu0 %v1400
        %v1402 = vpop.xlane.xlu0 %1401
        %v1403 = vsel %vm605, %v1383, -inf
        %1404 = vmax.xlane.f32.xlu0 %v1403
        %v1405 = vpop.xlane.xlu0 %1404
        %v1406 = vsel %vm605, %v1384, -inf
        %1407 = vmax.xlane.f32.xlu0 %v1406
        %v1408 = vpop.xlane.xlu0 %1407
        %v1409 = vsub.f32 %v1377, %v1387
        %v1410 = vsub.f32 %v1378, %v1390
        %v1411 = vsub.f32 %v1379, %v1393
        %v1412 = vsub.f32 %v1380, %v1396
        %v1413 = vsub.f32 %v1381, %v1399
        %v1414 = vsub.f32 %v1382, %v1402
        %v1415 = vsub.f32 %v1383, %v1405
        %v1416 = vsub.f32 %v1384, %v1408
        %v1417 = vmul.f32 %v1409, 1.442695
        %v1418 = vpow.pop %v1417
        %v1419 = vmul.f32 %v1410, 1.442695
        %v1420 = vpow.pop %v1419
        %v1421 = vmul.f32 %v1411, 1.442695
        %v1422 = vpow.pop %v1421
        %v1423 = vmul.f32 %v1412, 1.442695
        %v1424 = vpow.pop %v1423
        %v1425 = vmul.f32 %v1413, 1.442695
        %v1426 = vpow.pop %v1425
        %v1427 = vmul.f32 %v1414, 1.442695
        %v1428 = vpow.pop %v1427
        %v1429 = vmul.f32 %v1415, 1.442695
        %v1430 = vpow.pop %v1429
        %v1431 = vmul.f32 %v1416, 1.442695
        %v1432 = vpow.pop %v1431
        %v1433 = vsel %vm605, %v1418, 0.0
        %1434 = vadd.xlane.f32.xlu0 %v1433
        %v1435 = vpop.xlane.xlu0 %1434
        %v1436 = vsel %vm605, %v1420, 0.0
        %1437 = vadd.xlane.f32.xlu0 %v1436
        %v1438 = vpop.xlane.xlu0 %1437
        %v1439 = vsel %vm605, %v1422, 0.0
        %1440 = vadd.xlane.f32.xlu0 %v1439
        %v1441 = vpop.xlane.xlu0 %1440
        %v1442 = vsel %vm605, %v1424, 0.0
        %1443 = vadd.xlane.f32.xlu0 %v1442
        %v1444 = vpop.xlane.xlu0 %1443
        %v1445 = vsel %vm605, %v1426, 0.0
        %1446 = vadd.xlane.f32.xlu0 %v1445
        %v1447 = vpop.xlane.xlu0 %1446
        %v1448 = vsel %vm605, %v1428, 0.0
        %1449 = vadd.xlane.f32.xlu0 %v1448
        %v1450 = vpop.xlane.xlu0 %1449
        %v1451 = vsel %vm605, %v1430, 0.0
        %1452 = vadd.xlane.f32.xlu0 %v1451
        %v1453 = vpop.xlane.xlu0 %1452
        %v1454 = vsel %vm605, %v1432, 0.0
        %1455 = vadd.xlane.f32.xlu0 %v1454
        %v1456 = vpop.xlane.xlu0 %1455
        %v1457 = vrcp.pop %v1435
        %v1458 = vrcp.pop %v1438
        %v1459 = vrcp.pop %v1441
        %v1460 = vrcp.pop %v1444
        %v1461 = vrcp.pop %v1447
        %v1462 = vrcp.pop %v1450
        %v1463 = vrcp.pop %v1453
        %v1464 = vrcp.pop %v1456
        %v1465 = vmul.f32 %v1418, %v1457
        %v1466 = vmul.f32 %v1420, %v1458
        %v1467 = vmul.f32 %v1422, %v1459
        %v1468 = vmul.f32 %v1424, %v1460
        %v1469 = vmul.f32 %v1426, %v1461
        %v1470 = vmul.f32 %v1428, %v1462
        %v1471 = vmul.f32 %v1430, %v1463
        %v1472 = vmul.f32 %v1432, %v1464
        %v1473 = vpack.c.bf16 %v1465, %v1465
        %v1474 = vpack.c.bf16 %v1466, %v1466
        %v1475 = vpack.c.bf16 %v1467, %v1467
        %v1476 = vpack.c.bf16 %v1468, %v1468
        %v1477 = vpack.c.bf16 %v1469, %v1469
        %v1478 = vpack.c.bf16 %v1470, %v1470
        %v1479 = vpack.c.bf16 %v1471, %v1471
        %v1480 = vpack.c.bf16 %v1472, %v1472
        %v1482 = vsel %vm605, %v1473, 0
        %v1485 = vsel %vm609, %v947, 0
        %1487 = vmatprep.subr.bf16.mxu0 0
        %1488 = vmatpush1.bf16.msra.mxu0 %v1485
        %1489 = vmatprep.subr.bf16.mxu0 0
        %1490 = vmatpush1.bf16.msra.mxu0 0
        %1491 = vmatprep.subr.bf16.mxu0 0
        %1492 = vmatpush1.bf16.msra.mxu0 0
        %1493 = vmatprep.subr.bf16.mxu0 0
        %1494 = vmatpush1.bf16.msra.mxu0 0
        %1495 = vmatprep.subr.bf16.mxu0 0
        %1496 = vmatpush1.bf16.msra.mxu0 0
        %1497 = vmatprep.subr.bf16.mxu0 0
        %1498 = vmatpush1.bf16.msra.mxu0 0
        %1499 = vmatprep.subr.bf16.mxu0 0
        %1500 = vmatpush1.bf16.msra.mxu0 0
        %1501 = vmatprep.subr.bf16.mxu0 0
        %1502 = vmatpush1.bf16.msra.mxu0 0
        %1503 = vmatprep.subr.bf16.mxu0 0
        %1504 = vmatpush1.bf16.msra.mxu0 0
        %1505 = vmatprep.subr.bf16.mxu0 0
        %1506 = vmatpush1.bf16.msra.mxu0 0
        %1507 = vmatprep.subr.bf16.mxu0 0
        %1508 = vmatpush1.bf16.msra.mxu0 0
        %1509 = vmatprep.subr.bf16.mxu0 0
        %1510 = vmatpush1.bf16.msra.mxu0 0
        %1511 = vmatprep.subr.bf16.mxu0 0
        %1512 = vmatpush1.bf16.msra.mxu0 0
        %1513 = vmatprep.subr.bf16.mxu0 0
        %1514 = vmatpush1.bf16.msra.mxu0 0
        %1515 = vmatprep.subr.bf16.mxu0 0
        %1516 = vmatpush1.bf16.msra.mxu0 0
        %1517 = vmatprep.subr.bf16.mxu0 0
        %1518 = vmatpush1.bf16.msra.mxu0 0
        %1519 = vmatprep.mubr.bf16.mxu0 0
        %1520 = vmatmul.mubr.bf16.gmra.mrb[0].mxu0 %v1482
        %v1521 = vpop.f32.mrb[0].mxu0
        %v1522 = vadd.f32 0.0, %v1521
        %v1523 = vpop.f32.mrb[0].mxu0
        %v1524 = vpop.f32.mrb[0].mxu0
        %v1525 = vpop.f32.mrb[0].mxu0
        %1526 = vdwg.mxu0
        %v1528 = vsel %vm605, %v1474, 0
        %v1531 = vsel %vm609, %v980, 0
        %1533 = vmatprep.subr.bf16.mxu0 0
        %1534 = vmatpush1.bf16.msra.mxu0 %v1531
        %1535 = vmatprep.subr.bf16.mxu0 0
        %1536 = vmatpush1.bf16.msra.mxu0 0
        %1537 = vmatprep.subr.bf16.mxu0 0
        %1538 = vmatpush1.bf16.msra.mxu0 0
        %1539 = vmatprep.subr.bf16.mxu0 0
        %1540 = vmatpush1.bf16.msra.mxu0 0
        %1541 = vmatprep.subr.bf16.mxu0 0
        %1542 = vmatpush1.bf16.msra.mxu0 0
        %1543 = vmatprep.subr.bf16.mxu0 0
        %1544 = vmatpush1.bf16.msra.mxu0 0
        %1545 = vmatprep.subr.bf16.mxu0 0
        %1546 = vmatpush1.bf16.msra.mxu0 0
        %1547 = vmatprep.subr.bf16.mxu0 0
        %1548 = vmatpush1.bf16.msra.mxu0 0
        %1549 = vmatprep.subr.bf16.mxu0 0
        %1550 = vmatpush1.bf16.msra.mxu0 0
        %1551 = vmatprep.subr.bf16.mxu0 0
        %1552 = vmatpush1.bf16.msra.mxu0 0
        %1553 = vmatprep.subr.bf16.mxu0 0
        %1554 = vmatpush1.bf16.msra.mxu0 0
        %1555 = vmatprep.subr.bf16.mxu0 0
        %1556 = vmatpush1.bf16.msra.mxu0 0
        %1557 = vmatprep.subr.bf16.mxu0 0
        %1558 = vmatpush1.bf16.msra.mxu0 0
        %1559 = vmatprep.subr.bf16.mxu0 0
        %1560 = vmatpush1.bf16.msra.mxu0 0
        %1561 = vmatprep.subr.bf16.mxu0 0
        %1562 = vmatpush1.bf16.msra.mxu0 0
        %1563 = vmatprep.subr.bf16.mxu0 0
        %1564 = vmatpush1.bf16.msra.mxu0 0
        %1565 = vmatprep.mubr.bf16.mxu0 0
        %1566 = vmatmul.mubr.bf16.gmra.mrb[0].mxu0 %v1528
        %v1567 = vpop.f32.mrb[0].mxu0
        %v1568 = vadd.f32 0.0, %v1567
        %v1569 = vpop.f32.mrb[0].mxu0
        %v1570 = vpop.f32.mrb[0].mxu0
        %v1571 = vpop.f32.mrb[0].mxu0
        %1572 = vdwg.mxu0
        %v1574 = vsel %vm605, %v1475, 0
        %v1577 = vsel %vm609, %v982, 0
        %1579 = vmatprep.subr.bf16.mxu0 0
        %1580 = vmatpush1.bf16.msra.mxu0 %v1577
        %1581 = vmatprep.subr.bf16.mxu0 0
        %1582 = vmatpush1.bf16.msra.mxu0 0
        %1583 = vmatprep.subr.bf16.mxu0 0
        %1584 = vmatpush1.bf16.msra.mxu0 0
        %1585 = vmatprep.subr.bf16.mxu0 0
        %1586 = vmatpush1.bf16.msra.mxu0 0
        %1587 = vmatprep.subr.bf16.mxu0 0
        %1588 = vmatpush1.bf16.msra.mxu0 0
        %1589 = vmatprep.subr.bf16.mxu0 0
        %1590 = vmatpush1.bf16.msra.mxu0 0
        %1591 = vmatprep.subr.bf16.mxu0 0
        %1592 = vmatpush1.bf16.msra.mxu0 0
        %1593 = vmatprep.subr.bf16.mxu0 0
        %1594 = vmatpush1.bf16.msra.mxu0 0
        %1595 = vmatprep.subr.bf16.mxu0 0
        %1596 = vmatpush1.bf16.msra.mxu0 0
        %1597 = vmatprep.subr.bf16.mxu0 0
        %1598 = vmatpush1.bf16.msra.mxu0 0
        %1599 = vmatprep.subr.bf16.mxu0 0
        %1600 = vmatpush1.bf16.msra.mxu0 0
        %1601 = vmatprep.subr.bf16.mxu0 0
        %1602 = vmatpush1.bf16.msra.mxu0 0
        %1603 = vmatprep.subr.bf16.mxu0 0
        %1604 = vmatpush1.bf16.msra.mxu0 0
        %1605 = vmatprep.subr.bf16.mxu0 0
        %1606 = vmatpush1.bf16.msra.mxu0 0
        %1607 = vmatprep.subr.bf16.mxu0 0
        %1608 = vmatpush1.bf16.msra.mxu0 0
        %1609 = vmatprep.subr.bf16.mxu0 0
        %1610 = vmatpush1.bf16.msra.mxu0 0
        %1611 = vmatprep.mubr.bf16.mxu0 0
        %1612 = vmatmul.mubr.bf16.gmra.mrb[0].mxu0 %v1574
        %v1613 = vpop.f32.mrb[0].mxu0
        %v1614 = vadd.f32 0.0, %v1613
        %v1615 = vpop.f32.mrb[0].mxu0
        %v1616 = vpop.f32.mrb[0].mxu0
        %v1617 = vpop.f32.mrb[0].mxu0
        %1618 = vdwg.mxu0
        %v1620 = vsel %vm605, %v1476, 0
        %v1623 = vsel %vm609, %v984, 0
        %1625 = vmatprep.subr.bf16.mxu0 0
        %1626 = vmatpush1.bf16.msra.mxu0 %v1623
        %1627 = vmatprep.subr.bf16.mxu0 0
        %1628 = vmatpush1.bf16.msra.mxu0 0
        %1629 = vmatprep.subr.bf16.mxu0 0
        %1630 = vmatpush1.bf16.msra.mxu0 0
        %1631 = vmatprep.subr.bf16.mxu0 0
        %1632 = vmatpush1.bf16.msra.mxu0 0
        %1633 = vmatprep.subr.bf16.mxu0 0
        %1634 = vmatpush1.bf16.msra.mxu0 0
        %1635 = vmatprep.subr.bf16.mxu0 0
        %1636 = vmatpush1.bf16.msra.mxu0 0
        %1637 = vmatprep.subr.bf16.mxu0 0
        %1638 = vmatpush1.bf16.msra.mxu0 0
        %1639 = vmatprep.subr.bf16.mxu0 0
        %1640 = vmatpush1.bf16.msra.mxu0 0
        %1641 = vmatprep.subr.bf16.mxu0 0
        %1642 = vmatpush1.bf16.msra.mxu0 0
        %1643 = vmatprep.subr.bf16.mxu0 0
        %1644 = vmatpush1.bf16.msra.mxu0 0
        %1645 = vmatprep.subr.bf16.mxu0 0
        %1646 = vmatpush1.bf16.msra.mxu0 0
        %1647 = vmatprep.subr.bf16.mxu0 0
        %1648 = vmatpush1.bf16.msra.mxu0 0
        %1649 = vmatprep.subr.bf16.mxu0 0
        %1650 = vmatpush1.bf16.msra.mxu0 0
        %1651 = vmatprep.subr.bf16.mxu0 0
        %1652 = vmatpush1.bf16.msra.mxu0 0
        %1653 = vmatprep.subr.bf16.mxu0 0
        %1654 = vmatpush1.bf16.msra.mxu0 0
        %1655 = vmatprep.subr.bf16.mxu0 0
        %1656 = vmatpush1.bf16.msra.mxu0 0
        %1657 = vmatprep.mubr.bf16.mxu0 0
        %1658 = vmatmul.mubr.bf16.gmra.mrb[0].mxu0 %v1620
        %v1659 = vpop.f32.mrb[0].mxu0
        %v1660 = vadd.f32 0.0, %v1659
        %v1661 = vpop.f32.mrb[0].mxu0
        %v1662 = vpop.f32.mrb[0].mxu0
        %v1663 = vpop.f32.mrb[0].mxu0
        %1664 = vdwg.mxu0
        %v1666 = vsel %vm605, %v1477, 0
        %v1669 = vsel %vm609, %v986, 0
        %1671 = vmatprep.subr.bf16.mxu0 0
        %1672 = vmatpush1.bf16.msra.mxu0 %v1669
        %1673 = vmatprep.subr.bf16.mxu0 0
        %1674 = vmatpush1.bf16.msra.mxu0 0
        %1675 = vmatprep.subr.bf16.mxu0 0
        %1676 = vmatpush1.bf16.msra.mxu0 0
        %1677 = vmatprep.subr.bf16.mxu0 0
        %1678 = vmatpush1.bf16.msra.mxu0 0
        %1679 = vmatprep.subr.bf16.mxu0 0
        %1680 = vmatpush1.bf16.msra.mxu0 0
        %1681 = vmatprep.subr.bf16.mxu0 0
        %1682 = vmatpush1.bf16.msra.mxu0 0
        %1683 = vmatprep.subr.bf16.mxu0 0
        %1684 = vmatpush1.bf16.msra.mxu0 0
        %1685 = vmatprep.subr.bf16.mxu0 0
        %1686 = vmatpush1.bf16.msra.mxu0 0
        %1687 = vmatprep.subr.bf16.mxu0 0
        %1688 = vmatpush1.bf16.msra.mxu0 0
        %1689 = vmatprep.subr.bf16.mxu0 0
        %1690 = vmatpush1.bf16.msra.mxu0 0
        %1691 = vmatprep.subr.bf16.mxu0 0
        %1692 = vmatpush1.bf16.msra.mxu0 0
        %1693 = vmatprep.subr.bf16.mxu0 0
        %1694 = vmatpush1.bf16.msra.mxu0 0
        %1695 = vmatprep.subr.bf16.mxu0 0
        %1696 = vmatpush1.bf16.msra.mxu0 0
        %1697 = vmatprep.subr.bf16.mxu0 0
        %1698 = vmatpush1.bf16.msra.mxu0 0
        %1699 = vmatprep.subr.bf16.mxu0 0
        %1700 = vmatpush1.bf16.msra.mxu0 0
        %1701 = vmatprep.subr.bf16.mxu0 0
        %1702 = vmatpush1.bf16.msra.mxu0 0
        %1703 = vmatprep.mubr.bf16.mxu0 0
        %1704 = vmatmul.mubr.bf16.gmra.mrb[0].mxu0 %v1666
        %v1705 = vpop.f32.mrb[0].mxu0
        %v1706 = vadd.f32 0.0, %v1705
        %v1707 = vpop.f32.mrb[0].mxu0
        %v1708 = vpop.f32.mrb[0].mxu0
        %v1709 = vpop.f32.mrb[0].mxu0
        %1710 = vdwg.mxu0
        %v1712 = vsel %vm605, %v1478, 0
        %v1715 = vsel %vm609, %v988, 0
        %1717 = vmatprep.subr.bf16.mxu0 0
        %1718 = vmatpush1.bf16.msra.mxu0 %v1715
        %1719 = vmatprep.subr.bf16.mxu0 0
        %1720 = vmatpush1.bf16.msra.mxu0 0
        %1721 = vmatprep.subr.bf16.mxu0 0
        %1722 = vmatpush1.bf16.msra.mxu0 0
        %1723 = vmatprep.subr.bf16.mxu0 0
        %1724 = vmatpush1.bf16.msra.mxu0 0
        %1725 = vmatprep.subr.bf16.mxu0 0
        %1726 = vmatpush1.bf16.msra.mxu0 0
        %1727 = vmatprep.subr.bf16.mxu0 0
        %1728 = vmatpush1.bf16.msra.mxu0 0
        %1729 = vmatprep.subr.bf16.mxu0 0
        %1730 = vmatpush1.bf16.msra.mxu0 0
        %1731 = vmatprep.subr.bf16.mxu0 0
        %1732 = vmatpush1.bf16.msra.mxu0 0
        %1733 = vmatprep.subr.bf16.mxu0 0
        %1734 = vmatpush1.bf16.msra.mxu0 0
        %1735 = vmatprep.subr.bf16.mxu0 0
        %1736 = vmatpush1.bf16.msra.mxu0 0
        %1737 = vmatprep.subr.bf16.mxu0 0
        %1738 = vmatpush1.bf16.msra.mxu0 0
        %1739 = vmatprep.subr.bf16.mxu0 0
        %1740 = vmatpush1.bf16.msra.mxu0 0
        %1741 = vmatprep.subr.bf16.mxu0 0
        %1742 = vmatpush1.bf16.msra.mxu0 0
        %1743 = vmatprep.subr.bf16.mxu0 0
        %1744 = vmatpush1.bf16.msra.mxu0 0
        %1745 = vmatprep.subr.bf16.mxu0 0
        %1746 = vmatpush1.bf16.msra.mxu0 0
        %1747 = vmatprep.subr.bf16.mxu0 0
        %1748 = vmatpush1.bf16.msra.mxu0 0
        %1749 = vmatprep.mubr.bf16.mxu0 0
        %1750 = vmatmul.mubr.bf16.gmra.mrb[0].mxu0 %v1712
        %v1751 = vpop.f32.mrb[0].mxu0
        %v1752 = vadd.f32 0.0, %v1751
        %v1753 = vpop.f32.mrb[0].mxu0
        %v1754 = vpop.f32.mrb[0].mxu0
        %v1755 = vpop.f32.mrb[0].mxu0
        %1756 = vdwg.mxu0
        %v1758 = vsel %vm605, %v1479, 0
        %v1761 = vsel %vm609, %v990, 0
        %1763 = vmatprep.subr.bf16.mxu0 0
        %1764 = vmatpush1.bf16.msra.mxu0 %v1761
        %1765 = vmatprep.subr.bf16.mxu0 0
        %1766 = vmatpush1.bf16.msra.mxu0 0
        %1767 = vmatprep.subr.bf16.mxu0 0
        %1768 = vmatpush1.bf16.msra.mxu0 0
        %1769 = vmatprep.subr.bf16.mxu0 0
        %1770 = vmatpush1.bf16.msra.mxu0 0
        %1771 = vmatprep.subr.bf16.mxu0 0
        %1772 = vmatpush1.bf16.msra.mxu0 0
        %1773 = vmatprep.subr.bf16.mxu0 0
        %1774 = vmatpush1.bf16.msra.mxu0 0
        %1775 = vmatprep.subr.bf16.mxu0 0
        %1776 = vmatpush1.bf16.msra.mxu0 0
        %1777 = vmatprep.subr.bf16.mxu0 0
        %1778 = vmatpush1.bf16.msra.mxu0 0
        %1779 = vmatprep.subr.bf16.mxu0 0
        %1780 = vmatpush1.bf16.msra.mxu0 0
        %1781 = vmatprep.subr.bf16.mxu0 0
        %1782 = vmatpush1.bf16.msra.mxu0 0
        %1783 = vmatprep.subr.bf16.mxu0 0
        %1784 = vmatpush1.bf16.msra.mxu0 0
        %1785 = vmatprep.subr.bf16.mxu0 0
        %1786 = vmatpush1.bf16.msra.mxu0 0
        %1787 = vmatprep.subr.bf16.mxu0 0
        %1788 = vmatpush1.bf16.msra.mxu0 0
        %1789 = vmatprep.subr.bf16.mxu0 0
        %1790 = vmatpush1.bf16.msra.mxu0 0
        %1791 = vmatprep.subr.bf16.mxu0 0
        %1792 = vmatpush1.bf16.msra.mxu0 0
        %1793 = vmatprep.subr.bf16.mxu0 0
        %1794 = vmatpush1.bf16.msra.mxu0 0
        %1795 = vmatprep.mubr.bf16.mxu0 0
        %1796 = vmatmul.mubr.bf16.gmra.mrb[0].mxu0 %v1758
        %v1797 = vpop.f32.mrb[0].mxu0
        %v1798 = vadd.f32 0.0, %v1797
        %v1799 = vpop.f32.mrb[0].mxu0
        %v1800 = vpop.f32.mrb[0].mxu0
        %v1801 = vpop.f32.mrb[0].mxu0
        %1802 = vdwg.mxu0
        %v1804 = vsel %vm605, %v1480, 0
        %v1807 = vsel %vm609, %v992, 0
        %1809 = vmatprep.subr.bf16.mxu0 0
        %1810 = vmatpush1.bf16.msra.mxu0 %v1807
        %1811 = vmatprep.subr.bf16.mxu0 0
        %1812 = vmatpush1.bf16.msra.mxu0 0
        %1813 = vmatprep.subr.bf16.mxu0 0
        %1814 = vmatpush1.bf16.msra.mxu0 0
        %1815 = vmatprep.subr.bf16.mxu0 0
        %1816 = vmatpush1.bf16.msra.mxu0 0
        %1817 = vmatprep.subr.bf16.mxu0 0
        %1818 = vmatpush1.bf16.msra.mxu0 0
        %1819 = vmatprep.subr.bf16.mxu0 0
        %1820 = vmatpush1.bf16.msra.mxu0 0
        %1821 = vmatprep.subr.bf16.mxu0 0
        %1822 = vmatpush1.bf16.msra.mxu0 0
        %1823 = vmatprep.subr.bf16.mxu0 0
        %1824 = vmatpush1.bf16.msra.mxu0 0
        %1825 = vmatprep.subr.bf16.mxu0 0
        %1826 = vmatpush1.bf16.msra.mxu0 0
        %1827 = vmatprep.subr.bf16.mxu0 0
        %1828 = vmatpush1.bf16.msra.mxu0 0
        %1829 = vmatprep.subr.bf16.mxu0 0
        %1830 = vmatpush1.bf16.msra.mxu0 0
        %1831 = vmatprep.subr.bf16.mxu0 0
        %1832 = vmatpush1.bf16.msra.mxu0 0
        %1833 = vmatprep.subr.bf16.mxu0 0
        %1834 = vmatpush1.bf16.msra.mxu0 0
        %1835 = vmatprep.subr.bf16.mxu0 0
        %1836 = vmatpush1.bf16.msra.mxu0 0
        %1837 = vmatprep.subr.bf16.mxu0 0
        %1838 = vmatpush1.bf16.msra.mxu0 0
        %1839 = vmatprep.subr.bf16.mxu0 0
        %1840 = vmatpush1.bf16.msra.mxu0 0
        %1841 = vmatprep.mubr.bf16.mxu0 0
        %1842 = vmatmul.mubr.bf16.gmra.mrb[0].mxu0 %v1804
        %v1843 = vpop.f32.mrb[0].mxu0
        %v1844 = vadd.f32 0.0, %v1843
        %v1845 = vpop.f32.mrb[0].mxu0
        %v1846 = vpop.f32.mrb[0].mxu0
        %v1847 = vpop.f32.mrb[0].mxu0
        %1848 = vdwg.mxu0
        %1850 = vrot.lane.b32.xlu0 %v1568, 4
        %v1851 = vpop.permute.xlu0 %1850
        %1854 = vrot.lane.b32.xlu0 %v1614, 8
        %v1855 = vpop.permute.xlu0 %1854
        %1858 = vrot.lane.b32.xlu0 %v1660, 12
        %v1859 = vpop.permute.xlu0 %1858
        %1862 = vrot.lane.b32.xlu0 %v1706, 16
        %v1863 = vpop.permute.xlu0 %1862
        %1866 = vrot.lane.b32.xlu0 %v1752, 20
        %v1867 = vpop.permute.xlu0 %1866
        %1870 = vrot.lane.b32.xlu0 %v1798, 24
        %v1871 = vpop.permute.xlu0 %1870
        %1874 = vrot.lane.b32.xlu0 %v1844, 28
        %v1875 = vpop.permute.xlu0 %1874
        %v1877 = vsel %vm993, %v1522, %v1851
        %v1878 = vsel %vm605, %v1877, %v1855
        %vm1879 = vcmask 97280
        %v1880 = vsel %vm1879, %v1878, %v1859
        %vm1881 = vcmask 130048
        %v1882 = vsel %vm1881, %v1880, %v1863
        %vm1883 = vcmask 162816
        %v1884 = vsel %vm1883, %v1882, %v1867
        %vm1885 = vcmask 195584
        %v1886 = vsel %vm1885, %v1884, %v1871
        %vm1887 = vcmask 228352
        %v1888 = vsel %vm1887, %v1886, %v1875
        %v1889 = vpack.c.bf16 %v1888, %v1888
        %v1890 = vld [vmem:[#allocation14] sm:$0xf]
        %v1891 = vld [vmem:[#allocation14 + $0x4] sm:$0xf]
        %v1892 = vld [vmem:[#allocation14 + $0x8] sm:$0xf]
        %v1893 = vld [vmem:[#allocation14 + $0xc] sm:$0xf]
        %v1894 = vld [vmem:[%s14] sm:$0x1]
        %v1896 = vlaneseq
        %v1897 = vshrl.u32 %v1896, 7
        %v1898 = vsub.s32 0, %v1897
        %v1899 = vrot.slane %v1894, %v1898
        %v1905 = vunpack.c.l.b16 %v1890
        %v1906 = vunpack.c.l.b16 %v1891
        %v1907 = vunpack.c.l.b16 %v1892
        %v1908 = vunpack.c.l.b16 %v1893
        %v1909 = vpack.c.b16 %v1906, %v1905
        %v1910 = vpack.c.b16 %v1908, %v1907
        %v1914 = vsel %vm678, %v1889, 0
        %1916 = vmatprep.subr.bf16.mxu0 0
        %1917 = vmatpush1.bf16.msra.mxu0 %v1909
        %1918 = vmatprep.subr.bf16.mxu0 0
        %1919 = vmatpush1.bf16.msra.mxu0 %v1910
        %1920 = vmatprep.subr.bf16.mxu0 0
        %1921 = vmatpush1.bf16.msra.mxu0 0
        %1922 = vmatprep.subr.bf16.mxu0 0
        %1923 = vmatpush1.bf16.msra.mxu0 0
        %1924 = vmatprep.subr.bf16.mxu0 0
        %1925 = vmatpush1.bf16.msra.mxu0 0
        %1926 = vmatprep.subr.bf16.mxu0 0
        %1927 = vmatpush1.bf16.msra.mxu0 0
        %1928 = vmatprep.subr.bf16.mxu0 0
        %1929 = vmatpush1.bf16.msra.mxu0 0
        %1930 = vmatprep.subr.bf16.mxu0 0
        %1931 = vmatpush1.bf16.msra.mxu0 0
        %1932 = vmatprep.subr.bf16.mxu0 0
        %1933 = vmatpush1.bf16.msra.mxu0 0
        %1934 = vmatprep.subr.bf16.mxu0 0
        %1935 = vmatpush1.bf16.msra.mxu0 0
        %1936 = vmatprep.subr.bf16.mxu0 0
        %1937 = vmatpush1.bf16.msra.mxu0 0
        %1938 = vmatprep.subr.bf16.mxu0 0
        %1939 = vmatpush1.bf16.msra.mxu0 0
        %1940 = vmatprep.subr.bf16.mxu0 0
        %1941 = vmatpush1.bf16.msra.mxu0 0
        %1942 = vmatprep.subr.bf16.mxu0 0
        %1943 = vmatpush1.bf16.msra.mxu0 0
        %1944 = vmatprep.subr.bf16.mxu0 0
        %1945 = vmatpush1.bf16.msra.mxu0 0
        %1946 = vmatprep.subr.bf16.mxu0 0
        %1947 = vmatpush1.bf16.msra.mxu0 0
        %1948 = vmatprep.mubr.bf16.mxu0 0
        %1949 = vmatmul.mubr.bf16.gmra.mrb[0].mxu0 %v1914
        %v1950 = vpop.f32.mrb[0].mxu0
        %v1951 = vadd.f32 %v1899, %v1950
        %v1952 = vpop.f32.mrb[0].mxu0
        %v1953 = vpop.f32.mrb[0].mxu0
        %v1954 = vpop.f32.mrb[0].mxu0
        %1955 = vdwg.mxu0
        %v1956 = vadd.f32 %v1951, %v717
        %1957 = vst.msk [vmem:[%s590] sm:$0xff] %vm678, %v1956
        %s1958 = sand.u32 %s362, 1
        %s1959 = scalar_lea.sflag [#allocation4], %s1958
        %s1960 = sand.u32 %s362, 1
        %s1961 = smul.addr %s1960, 8
        %s1962 = scalar_lea.vmem [#allocation16], %s1961
        // Predicated region
        $region113: #{tpu_custom_call.1} parent=79 // pred_check
          %p1963 = pneg %p372
        $region114: #{tpu_custom_call.1} parent=79 // pred_check_branch
          %1965 = sbr.rel (%p1963) target = $region116
        $region115: #{tpu_custom_call.1} parent=79 // pred_region
          %s1967 = ssub.s32 128, 128
          %1968 = vsyncadd %s1959, %s1967
          %s1969 = smul.addr %s34, 128
          %s1970 = scalar_lea.hbm %s15, %s1969
          %s1972 = sshll.u32 %s1962, 4
          %s1973 = int_to_ptr.vmem [resolvable:$true] %s1972
          %1975 = dma.vmem_to_hbm [thread:$0]  %s1973, 128, %s1970, %s1959
        $region116: #{tpu_custom_call.1} parent=79 // pred_fallthru
          _
      $region80: #{tpu_custom_call.1} parent=5 // pred_fallthru
        _
      %p1976 = scmp.le.s32.totalorder 2, %s29
      // Predicated region
      $region117: #{tpu_custom_call.1} parent=5 // pred_check
        %p1977 = pneg %p1976
      $region118: #{tpu_custom_call.1} parent=5 // pred_check_branch
        %1979 = sbr.rel (%p1977) target = $region120
      $region119: #{tpu_custom_call.1} parent=5 // pred_region
        %s1980 = ssub.s32 %s29, 2
        // Predicated region
        $region121: #{tpu_custom_call.1} parent=119 // pred_check
          %p1981 = pneg %p378
        $region122: #{tpu_custom_call.1} parent=119 // pred_check_branch
          %1983 = sbr.rel (%p1981) target = $region124
        $region123: #{tpu_custom_call.1} parent=119 // pred_region
          %s1984 = sand.u32 %s363, 1
          %s1985 = scalar_lea.sflag [#allocation4], %s1984
          %s1986 = sand.u32 %s363, 1
          %s1987 = smul.addr %s1986, 8
          %s1988 = scalar_lea.vmem [#allocation16], %s1987
          %1989 = dma.done %s1985, 128
        $region124: #{tpu_custom_call.1} parent=119 // pred_fallthru
          _
      $region120: #{tpu_custom_call.1} parent=5 // pred_fallthru
        _
    $region6: #{tpu_custom_call.1} parent=1 // loop_footer
      %s33 = sadd.s32 1, %s29
    $region7: #{tpu_custom_call.1} parent=1 // loop_footer_branch
      %28 = sbr.rel target = $region3
    $region8: #{tpu_custom_call.1} parent=1 // loop_exit
      _
    %1990 = vsyncpa [#allocation3], 1
    %s1991 = scalar_lea.sflag [#allocation3], 1
    %1992 = vsyncpa %s1991, 1
    %1993 = vsyncpa [#allocation6], 1
    %1994 = vsyncpa [#allocation9], 1
    %1995 = vsyncpa [#allocation12], 1
    %1996 = vsyncpa [#allocation15], 1
    %1997 = vsyncpa [#allocation4], 1
    %s1998 = scalar_lea.sflag [#allocation4], 1
    %1999 = vsyncpa %s1998, 1

</llo_original>
